<compile_context>
chip_gen: v7x
topology: tpu7x:2x2x1
jax: 0.10.0
libtpu: 0.0.40
codegen_flags: <defaults>
</compile_context>

<pallas_src>
import functools

import jax
import jax.numpy as jnp
from jax.experimental import pallas as pl
from jax.experimental.pallas import tpu as pltpu


def _round_up(x, m):
    return (x + m - 1) // m * m


def _pick_tile(n_pad, candidates):
    for c in candidates:
        if n_pad % c == 0:
            return c
    return 128  # n_pad is always a multiple of 128


def _supcon_kernel(lab_r_ref, lab_c_ref, fr_ref, fc_ref, out_ref,
                   m_sc, l_sc, sa_sc, sm_sc, *,
                   inv_temp, loss_scale, n_valid):
    # lab_r_ref: [TM, 1] int32   row labels (view-major stacked)
    # lab_c_ref: [1, TN] int32   column labels
    # fr_ref   : [TM, D] anchor feature rows
    # fc_ref   : [TN, D] contrast feature rows
    # out_ref  : [TM, 1] f32     per-anchor loss (written on last column tile)
    # scratch  : [TM, 1] f32     running max / sum-exp / sum(mask*adc) / sum(mask)
    i = pl.program_id(0)          # row-tile index     ("parallel")
    j = pl.program_id(1)          # column-tile index  ("arbitrary", reduction)

    tm = fr_ref.shape[0]
    tn = fc_ref.shape[0]

    @pl.when(j == 0)
    def _():
        m_sc[...] = jnp.full((tm, 1), -jnp.inf, dtype=jnp.float32)
        l_sc[...] = jnp.zeros((tm, 1), dtype=jnp.float32)
        sa_sc[...] = jnp.zeros((tm, 1), dtype=jnp.float32)
        sm_sc[...] = jnp.zeros((tm, 1), dtype=jnp.float32)

    # Similarity tile on the MXU: contract the feature (last) axis of both
    # operands directly -- no explicit transpose / relayout of the column tile.
    adc = jax.lax.dot_general(
        fr_ref[...], fc_ref[...],
        dimension_numbers=(((1,), (1,)), ((), ())),
        preferred_element_type=jnp.float32) * inv_temp            # [tm, tn] f32

    # Masks rebuilt in-kernel (one VPU compare+select each); padded columns are
    # excluded via col_valid, the diagonal via row!=col.
    row_ids = i * tm + jax.lax.broadcasted_iota(jnp.int32, (tm, tn), 0)
    col_ids = j * tn + jax.lax.broadcasted_iota(jnp.int32, (tm, tn), 1)
    col_valid = col_ids < n_valid
    logits_mask = jnp.logical_and(row_ids != col_ids, col_valid)
    pos_mask = jnp.logical_and(lab_r_ref[...] == lab_c_ref[...], logits_mask)
    lmask_f = logits_mask.astype(jnp.float32)
    pmask_f = pos_mask.astype(jnp.float32)

    # Online (flash-style) log-sum-exp over valid, non-self columns.  The row
    # max includes the self-similarity diagonal (like the PyTorch reference);
    # the shift cancels exactly in mean_log_prob_pos.
    adc_for_max = jnp.where(col_valid, adc, -jnp.inf)
    m_new = jnp.maximum(m_sc[...], jnp.max(adc_for_max, axis=1, keepdims=True))
    alpha = jnp.exp(m_sc[...] - m_new)
    p = jnp.exp(adc - m_new) * lmask_f
    l_sc[...] = alpha * l_sc[...] + jnp.sum(p, axis=1, keepdims=True)
    m_sc[...] = m_new

    # Accumulate sum(mask * logits) and sum(mask) (max shift not needed here).
    sa_sc[...] += jnp.sum(pmask_f * adc, axis=1, keepdims=True)
    sm_sc[...] += jnp.sum(pmask_f, axis=1, keepdims=True)

    @pl.when(j == pl.num_programs(1) - 1)
    def _():
        lse = m_sc[...] + jnp.log(l_sc[...])                      # [tm, 1]
        cnt = sm_sc[...]
        safe_cnt = jnp.where(cnt > 0.0, cnt, 1.0)
        # mean log-prob over positives; rows with no positives yield 0 instead
        # of the reference's 0/0 = NaN (guard requested in the perf review).
        mean_log_prob_pos = jnp.where(
            cnt > 0.0, (sa_sc[...] - cnt * lse) / safe_cnt, 0.0)
        out_ref[...] = (-loss_scale) * mean_log_prob_pos


def supcon_loss(features, labels=None, mask=None, *,
                temperature=0.07, contrast_mode='all', base_temperature=0.07,
                matmul_dtype=None):
    """JAX/Pallas equivalent of SupConLoss.forward (contrast_mode='all')."""
    if features.ndim < 3:
        raise ValueError('`features` needs to be [bsz, n_views, ...]')
    if features.ndim > 3:
        features = features.reshape(features.shape[0], features.shape[1], -1)
    bsz, n_views, dim = features.shape

    if labels is not None and mask is not None:
        raise ValueError('Cannot define both `labels` and `mask`')
    if mask is not None:
        # TODO(synk): arbitrary (possibly asymmetric) [bsz, bsz] masks are not
        # expressible as in-kernel label equality; only labels / SimCLR paths
        # are fused (avoids all O(N^2) mask HBM traffic).
        raise NotImplementedError(
            'explicit `mask` is not supported by the Pallas kernel')
    if labels is None:
        eff_labels = jnp.arange(bsz, dtype=jnp.int32)      # SimCLR: identity mask
    else:
        labels = jnp.asarray(labels).reshape(-1)
        if labels.shape[0] != bsz:
            raise ValueError('Num of labels does not match num of features')
        eff_labels = labels.astype(jnp.int32)

    if contrast_mode == 'one':
        # TODO(synk): 'one' mode needs a rectangular [bsz, N] variant of the kernel.
        raise NotImplementedError("Pallas kernel implemented for contrast_mode='all'")
    elif contrast_mode != 'all':
        raise ValueError('Unknown mode: {}'.format(contrast_mode))

    anchor_count = contrast_count = n_views
    N = bsz * anchor_count

    if matmul_dtype is None:
        matmul_dtype = (jnp.bfloat16 if features.dtype == jnp.bfloat16
                        else jnp.float32)

    # torch.cat(torch.unbind(features, 1), 0): view-major stacking -> [N, dim]
    contrast_feature = jnp.transpose(features, (1, 0, 2)).reshape(N, dim)
    # label of row i is labels[i % bsz] after view-major stacking
    labels_n = jnp.tile(eff_labels, anchor_count)

    # Pad to lane/sublane friendly sizes; zero rows / feature columns are inert
    # and padded columns are masked out inside the kernel.
    N_pad = _round_up(N, 128)
    D_pad = _round_up(dim, 128)
    feat = jnp.pad(contrast_feature.astype(matmul_dtype),
                   ((0, N_pad - N), (0, D_pad - dim)))
    lab = jnp.pad(labels_n, (0, N_pad - N), constant_values=-1)
    lab_row = lab.reshape(N_pad, 1)
    lab_col = lab.reshape(1, N_pad)

    TM = _pick_tile(N_pad, (256, 128))
    TN = _pick_tile(N_pad, (512, 256, 128))
    gr, gc = N_pad // TM, N_pad // TN

    itemsize = 2 if matmul_dtype == jnp.bfloat16 else 4
    # Explicit VMEM budget: double-buffered feature/label tiles + [TM, TN]
    # f32 temporaries + scratch; keep well under v7x's 64 MiB per-TC VMEM.
    vmem_est = (2 * (TM + TN) * D_pad * itemsize      # feature tiles (x2 buffers)
                + 2 * (TM + TN) * 4                   # label tiles
                + 8 * TM * TN * 4                     # adc / masks / exp temporaries
                + 8 * TM * 4)                         # scratch + output block
    vmem_limit = int(min(max(2 * vmem_est, 16 * 1024 * 1024), 48 * 1024 * 1024))

    kernel = functools.partial(
        _supcon_kernel,
        inv_temp=float(1.0 / temperature),
        loss_scale=float(temperature / base_temperature),
        n_valid=N)

    cost = pl.CostEstimate(
        flops=2 * N_pad * N_pad * D_pad + 12 * N_pad * N_pad,
        transcendentals=N_pad * N_pad + 2 * N_pad,
        bytes_accessed=(gr * TM * D_pad + gr * gc * TN * D_pad) * itemsize
                       + 3 * N_pad * 4)

    grid_spec = pltpu.PrefetchScalarGridSpec(
        num_scalar_prefetch=0,
        grid=(gr, gc),
        in_specs=[
            pl.BlockSpec((TM, 1), lambda i, j: (i, 0)),       # row labels
            pl.BlockSpec((1, TN), lambda i, j: (0, j)),       # column labels
            pl.BlockSpec((TM, D_pad), lambda i, j: (i, 0)),   # anchor rows
            pl.BlockSpec((TN, D_pad), lambda i, j: (j, 0)),   # contrast columns
        ],
        out_specs=pl.BlockSpec((TM, 1), lambda i, j: (i, 0)),
        scratch_shapes=[pltpu.VMEM((TM, 1), jnp.float32) for _ in range(4)])

    per_row = pl.pallas_call(
        kernel,
        out_shape=jax.ShapeDtypeStruct((N_pad, 1), jnp.float32),
        grid_spec=grid_spec,
        compiler_params=pltpu.CompilerParams(
            dimension_semantics=("parallel", "arbitrary"),
            vmem_limit_bytes=vmem_limit),
        cost_estimate=cost,
    )(lab_row, lab_col, feat, feat)

    # Final scalar mean over the N real anchors (tiny O(N) epilogue).
    return jnp.mean(per_row[:N, 0])


def _supcon_loss_ref(features, labels=None, *,
                     temperature=0.07, base_temperature=0.07):
    """Pure-JAX reference (mirrors the PyTorch module, mode='all')."""
    features = features.astype(jnp.float32)
    if features.ndim > 3:
        features = features.reshape(features.shape[0], features.shape[1], -1)
    bsz, n_views, dim = features.shape
    if labels is None:
        mask = jnp.eye(bsz, dtype=jnp.float32)
    else:
        labels = labels.reshape(-1, 1)
        mask = (labels == labels.T).astype(jnp.float32)
    cf = jnp.transpose(features, (1, 0, 2)).reshape(bsz * n_views, dim)
    adc = (cf @ cf.T) / temperature
    logits = adc - jnp.max(adc, axis=1, keepdims=True)
    N = bsz * n_views
    mask = jnp.tile(mask, (n_views, n_views))
    lmask = 1.0 - jnp.eye(N, dtype=jnp.float32)
    mask = mask * lmask
    exp_logits = jnp.exp(logits) * lmask
    log_prob = logits - jnp.log(jnp.sum(exp_logits, axis=1, keepdims=True))
    mlpp = jnp.sum(mask * log_prob, axis=1) / jnp.sum(mask, axis=1)
    loss = -(temperature / base_temperature) * mlpp
    return jnp.mean(loss)


if __name__ == "__main__":
    key = jax.random.PRNGKey(0)
    k_feat, k_lab = jax.random.split(key)

    bsz, n_views, dim = 8, 2, 32
    features = jax.random.normal(k_feat, (bsz, n_views, dim), dtype=jnp.float32)
    # L2-normalize features, as typically done before SupConLoss
    features = features / jnp.linalg.norm(features, axis=-1, keepdims=True)
    labels = jax.random.randint(k_lab, (bsz,), 0, 4)

    # Supervised path, f32 MXU inputs (matches PyTorch numerics tightly).
    loss = jax.block_until_ready(supcon_loss(features, labels=labels))
    ref = _supcon_loss_ref(features, labels=labels)
    assert jnp.isfinite(loss), "loss is not finite"
    assert jnp.allclose(loss, ref, rtol=1e-4, atol=1e-4), (loss, ref)

    # Unsupervised (SimCLR) degenerate case.
    loss_simclr = jax.block_until_ready(supcon_loss(features))
    ref_simclr = _supcon_loss_ref(features)
    assert jnp.allclose(loss_simclr, ref_simclr, rtol=1e-4, atol=1e-4), (
        loss_simclr, ref_simclr)

    # bf16 MXU inputs (perf-review option): softmax math stays f32; looser tol.
    loss_bf16 = jax.block_until_ready(
        supcon_loss(features, labels=labels, matmul_dtype=jnp.bfloat16))
    assert jnp.isfinite(loss_bf16), "bf16 loss is not finite"
    assert jnp.allclose(loss_bf16, ref, rtol=5e-2, atol=5e-2), (loss_bf16, ref)

    print("KERNEL_OK")
</pallas_src>

<mosaic_0001>
module attributes {stable_mosaic.version = 11 : i64} {
  func.func @_supcon_kernel(%arg0: i32, %arg1: i32, %arg2: memref<128x1xi32, #tpu.memory_space<vmem>>, %arg3: memref<1x128xi32, #tpu.memory_space<vmem>>, %arg4: memref<128x128xf32, #tpu.memory_space<vmem>>, %arg5: memref<128x128xf32, #tpu.memory_space<vmem>>, %arg6: memref<128x1xf32, #tpu.memory_space<vmem>>, %arg7: memref<128x1xf32, #tpu.memory_space<vmem>>, %arg8: memref<128x1xf32, #tpu.memory_space<vmem>>, %arg9: memref<128x1xf32, #tpu.memory_space<vmem>>, %arg10: memref<128x1xf32, #tpu.memory_space<vmem>>) attributes {dimension_semantics = [#tpu.dimension_semantics<parallel>, #tpu.dimension_semantics<arbitrary>], iteration_bounds = array<i64: 1, 1>, scalar_prefetch = 0 : i64, scratch_operands = 4 : i64, tpu.core_type = #tpu.core_type<tc>, window_params = [{transform_indices = @transform_0, window_bounds = array<i64: 128, 1>}, {transform_indices = @transform_1, window_bounds = array<i64: 1, 128>}, {transform_indices = @transform_2, window_bounds = array<i64: 128, 128>}, {transform_indices = @transform_3, window_bounds = array<i64: 128, 128>}, {transform_indices = @transform_4, window_bounds = array<i64: 128, 1>}]} {
    %c0_i32 = arith.constant 0 : i32
    %0 = arith.cmpi eq, %arg1, %c0_i32 : i32
    %1 = arith.extui %0 : i1 to i32
    %c0_i32_0 = arith.constant 0 : i32
    %2 = arith.cmpi ne, %1, %c0_i32_0 : i32
    scf.if %2 {
      %cst_35 = arith.constant 0xFF800000 : f32
      %64 = vector.broadcast %cst_35 : f32 to vector<128x1xf32>
      %c0_36 = arith.constant 0 : index
      %c0_37 = arith.constant 0 : index
      %65 = vector.load %arg7[%c0_36, %c0_37] : memref<128x1xf32, #tpu.memory_space<vmem>>, vector<128x1xf32>
      tpu.vector_store %arg7[%c0_36, %c0_37], %64 {strides = array<i32>} : memref<128x1xf32, #tpu.memory_space<vmem>>, vector<128x1xf32>,
      %cst_38 = arith.constant 0.000000e+00 : f32
      %66 = vector.broadcast %cst_38 : f32 to vector<128x1xf32>
      %c0_39 = arith.constant 0 : index
      %c0_40 = arith.constant 0 : index
      %67 = vector.load %arg8[%c0_39, %c0_40] : memref<128x1xf32, #tpu.memory_space<vmem>>, vector<128x1xf32>
      tpu.vector_store %arg8[%c0_39, %c0_40], %66 {strides = array<i32>} : memref<128x1xf32, #tpu.memory_space<vmem>>, vector<128x1xf32>,
      %cst_41 = arith.constant 0.000000e+00 : f32
      %68 = vector.broadcast %cst_41 : f32 to vector<128x1xf32>
      %c0_42 = arith.constant 0 : index
      %c0_43 = arith.constant 0 : index
      %69 = vector.load %arg9[%c0_42, %c0_43] : memref<128x1xf32, #tpu.memory_space<vmem>>, vector<128x1xf32>
      tpu.vector_store %arg9[%c0_42, %c0_43], %68 {strides = array<i32>} : memref<128x1xf32, #tpu.memory_space<vmem>>, vector<128x1xf32>,
      %cst_44 = arith.constant 0.000000e+00 : f32
      %70 = vector.broadcast %cst_44 : f32 to vector<128x1xf32>
      %c0_45 = arith.constant 0 : index
      %c0_46 = arith.constant 0 : index
      %71 = vector.load %arg10[%c0_45, %c0_46] : memref<128x1xf32, #tpu.memory_space<vmem>>, vector<128x1xf32>
      tpu.vector_store %arg10[%c0_45, %c0_46], %70 {strides = array<i32>} : memref<128x1xf32, #tpu.memory_space<vmem>>, vector<128x1xf32>,
    } else {
    }
    %c0 = arith.constant 0 : index
    %c0_1 = arith.constant 0 : index
    %3 = vector.load %arg4[%c0, %c0_1] : memref<128x128xf32, #tpu.memory_space<vmem>>, vector<128x128xf32>
    %c0_2 = arith.constant 0 : index
    %c0_3 = arith.constant 0 : index
    %4 = vector.load %arg5[%c0_2, %c0_3] : memref<128x128xf32, #tpu.memory_space<vmem>>, vector<128x128xf32>
    %cst = arith.constant dense<0.000000e+00> : vector<128x128xf32>
    %5 = tpu.matmul %3, %4, %cst {dimension_numbers = #tpu.dot_dimension_numbers<[1], [1], [0], [0], [0, 0, 1, 0], [], []>} : vector<128x128xf32>, vector<128x128xf32>, vector<128x128xf32> -> vector<128x128xf32>
    %cst_4 = arith.constant 14.2857141 : f32
    %6 = vector.broadcast %cst_4 : f32 to vector<128x128xf32>
    %7 = arith.mulf %5, %6 : vector<128x128xf32>
    %c128_i32 = arith.constant 128 : i32
    %8 = arith.muli %arg0, %c128_i32 : i32
    %9 = tpu.iota {dimensions = array<i32: 0>} : vector<128x128xi32>
    %10 = vector.broadcast %8 : i32 to vector<128x128xi32>
    %11 = arith.addi %10, %9 : vector<128x128xi32>
    %c128_i32_5 = arith.constant 128 : i32
    %12 = arith.muli %arg1, %c128_i32_5 : i32
    %13 = tpu.iota {dimensions = array<i32: 1>} : vector<128x128xi32>
    %14 = vector.broadcast %12 : i32 to vector<128x128xi32>
    %15 = arith.addi %14, %13 : vector<128x128xi32>
    %c16_i32 = arith.constant 16 : i32
    %16 = vector.broadcast %c16_i32 : i32 to vector<128x128xi32>
    %17 = arith.cmpi slt, %15, %16 : vector<128x128xi32>
    %18 = arith.cmpi ne, %11, %15 : vector<128x128xi32>
    %19 = arith.andi %18, %17 : vector<128x128xi1>
    %c0_6 = arith.constant 0 : index
    %c0_7 = arith.constant 0 : index
    %20 = vector.load %arg2[%c0_6, %c0_7] : memref<128x1xi32, #tpu.memory_space<vmem>>, vector<128x1xi32>
    %c0_8 = arith.constant 0 : index
    %c0_9 = arith.constant 0 : index
    %21 = vector.load %arg3[%c0_8, %c0_9] : memref<1x128xi32, #tpu.memory_space<vmem>>, vector<1x128xi32>
    %22 = vector.broadcast %20 : vector<128x1xi32> to vector<128x128xi32>
    %23 = vector.broadcast %21 : vector<1x128xi32> to vector<128x128xi32>
    %24 = arith.cmpi eq, %22, %23 : vector<128x128xi32>
    %25 = arith.andi %24, %19 : vector<128x128xi1>
    %26 = arith.extui %19 : vector<128x128xi1> to vector<128x128xi32>
    %27 = arith.sitofp %26 : vector<128x128xi32> to vector<128x128xf32>
    %28 = arith.extui %25 : vector<128x128xi1> to vector<128x128xi32>
    %29 = arith.sitofp %28 : vector<128x128xi32> to vector<128x128xf32>
    %cst_10 = arith.constant 0xFF800000 : f32
    %30 = vector.broadcast %cst_10 : f32 to vector<128x128xf32>
    %31 = arith.select %17, %7, %30 : vector<128x128xi1>, vector<128x128xf32>
    %c0_11 = arith.constant 0 : index
    %c0_12 = arith.constant 0 : index
    %32 = vector.load %arg7[%c0_11, %c0_12] : memref<128x1xf32, #tpu.memory_space<vmem>>, vector<128x1xf32>
    %cst_13 = arith.constant dense<0xFF800000> : vector<128xf32>
    %33 = vector.multi_reduction <maximumf>, %31, %cst_13 [1] : vector<128x128xf32> to vector<128xf32>
    %34 = vector.shape_cast %33 : vector<128xf32> to vector<128x1xf32>
    %35 = arith.maximumf %32, %34 : vector<128x1xf32>
    %c0_14 = arith.constant 0 : index
    %c0_15 = arith.constant 0 : index
    %36 = vector.load %arg7[%c0_14, %c0_15] : memref<128x1xf32, #tpu.memory_space<vmem>>, vector<128x1xf32>
    %37 = arith.subf %36, %35 : vector<128x1xf32>
    %38 = math.exp %37 : vector<128x1xf32>
    %39 = vector.broadcast %35 : vector<128x1xf32> to vector<128x128xf32>
    %40 = arith.subf %7, %39 : vector<128x128xf32>
    %41 = math.exp %40 : vector<128x128xf32>
    %42 = arith.mulf %41, %27 : vector<128x128xf32>
    %c0_16 = arith.constant 0 : index
    %c0_17 = arith.constant 0 : index
    %43 = vector.load %arg8[%c0_16, %c0_17] : memref<128x1xf32, #tpu.memory_space<vmem>>, vector<128x1xf32>
    %44 = arith.mulf %38, %43 : vector<128x1xf32>
    %cst_18 = arith.constant dense<0.000000e+00> : vector<128xf32>
    %45 = vector.multi_reduction <add>, %42, %cst_18 [1] : vector<128x128xf32> to vector<128xf32>
    %46 = vector.shape_cast %45 : vector<128xf32> to vector<128x1xf32>
    %47 = arith.addf %44, %46 : vector<128x1xf32>
    %c0_19 = arith.constant 0 : index
    %c0_20 = arith.constant 0 : index
    %48 = vector.load %arg8[%c0_19, %c0_20] : memref<128x1xf32, #tpu.memory_space<vmem>>, vector<128x1xf32>
    tpu.vector_store %arg8[%c0_19, %c0_20], %47 {strides = array<i32>} : memref<128x1xf32, #tpu.memory_space<vmem>>, vector<128x1xf32>,
    %c0_21 = arith.constant 0 : index
    %c0_22 = arith.constant 0 : index
    %49 = vector.load %arg7[%c0_21, %c0_22] : memref<128x1xf32, #tpu.memory_space<vmem>>, vector<128x1xf32>
    tpu.vector_store %arg7[%c0_21, %c0_22], %35 {strides = array<i32>} : memref<128x1xf32, #tpu.memory_space<vmem>>, vector<128x1xf32>,
    %c0_23 = arith.constant 0 : index
    %c0_24 = arith.constant 0 : index
    %50 = vector.load %arg9[%c0_23, %c0_24] : memref<128x1xf32, #tpu.memory_space<vmem>>, vector<128x1xf32>
    %51 = arith.mulf %29, %7 : vector<128x128xf32>
    %cst_25 = arith.constant dense<0.000000e+00> : vector<128xf32>
    %52 = vector.multi_reduction <add>, %51, %cst_25 [1] : vector<128x128xf32> to vector<128xf32>
    %53 = vector.shape_cast %52 : vector<128xf32> to vector<128x1xf32>
    %54 = arith.addf %50, %53 : vector<128x1xf32>
    %c0_26 = arith.constant 0 : index
    %c0_27 = arith.constant 0 : index
    %55 = vector.load %arg9[%c0_26, %c0_27] : memref<128x1xf32, #tpu.memory_space<vmem>>, vector<128x1xf32>
    tpu.vector_store %arg9[%c0_26, %c0_27], %54 {strides = array<i32>} : memref<128x1xf32, #tpu.memory_space<vmem>>, vector<128x1xf32>,
    %c0_28 = arith.constant 0 : index
    %c0_29 = arith.constant 0 : index
    %56 = vector.load %arg10[%c0_28, %c0_29] : memref<128x1xf32, #tpu.memory_space<vmem>>, vector<128x1xf32>
    %cst_30 = arith.constant dense<0.000000e+00> : vector<128xf32>
    %57 = vector.multi_reduction <add>, %29, %cst_30 [1] : vector<128x128xf32> to vector<128xf32>
    %58 = vector.shape_cast %57 : vector<128xf32> to vector<128x1xf32>
    %59 = arith.addf %56, %58 : vector<128x1xf32>
    %c0_31 = arith.constant 0 : index
    %c0_32 = arith.constant 0 : index
    %60 = vector.load %arg10[%c0_31, %c0_32] : memref<128x1xf32, #tpu.memory_space<vmem>>, vector<128x1xf32>
    tpu.vector_store %arg10[%c0_31, %c0_32], %59 {strides = array<i32>} : memref<128x1xf32, #tpu.memory_space<vmem>>, vector<128x1xf32>,
    %c0_i32_33 = arith.constant 0 : i32
    %61 = arith.cmpi eq, %arg1, %c0_i32_33 : i32
    %62 = arith.extui %61 : i1 to i32
    %c0_i32_34 = arith.constant 0 : i32
    %63 = arith.cmpi ne, %62, %c0_i32_34 : i32
    scf.if %63 {
      %c0_35 = arith.constant 0 : index
      %c0_36 = arith.constant 0 : index
      %64 = vector.load %arg7[%c0_35, %c0_36] : memref<128x1xf32, #tpu.memory_space<vmem>>, vector<128x1xf32>
      %c0_37 = arith.constant 0 : index
      %c0_38 = arith.constant 0 : index
      %65 = vector.load %arg8[%c0_37, %c0_38] : memref<128x1xf32, #tpu.memory_space<vmem>>, vector<128x1xf32>
      %66 = math.log %65 : vector<128x1xf32>
      %67 = arith.addf %64, %66 : vector<128x1xf32>
      %c0_39 = arith.constant 0 : index
      %c0_40 = arith.constant 0 : index
      %68 = vector.load %arg10[%c0_39, %c0_40] : memref<128x1xf32, #tpu.memory_space<vmem>>, vector<128x1xf32>
      %cst_41 = arith.constant 0.000000e+00 : f32
      %69 = vector.broadcast %cst_41 : f32 to vector<128x1xf32>
      %70 = arith.cmpf ogt, %68, %69 : vector<128x1xf32>
      %cst_42 = arith.constant 1.000000e+00 : f32
      %71 = vector.broadcast %cst_42 : f32 to vector<128x1xf32>
      %72 = arith.select %70, %68, %71 : vector<128x1xi1>, vector<128x1xf32>
      %cst_43 = arith.constant 0.000000e+00 : f32
      %73 = vector.broadcast %cst_43 : f32 to vector<128x1xf32>
      %74 = arith.cmpf ogt, %68, %73 : vector<128x1xf32>
      %c0_44 = arith.constant 0 : index
      %c0_45 = arith.constant 0 : index
      %75 = vector.load %arg9[%c0_44, %c0_45] : memref<128x1xf32, #tpu.memory_space<vmem>>, vector<128x1xf32>
      %76 = arith.mulf %68, %67 : vector<128x1xf32>
      %77 = arith.subf %75, %76 : vector<128x1xf32>
      %78 = arith.divf %77, %72 : vector<128x1xf32>
      %cst_46 = arith.constant 0.000000e+00 : f32
      %79 = vector.broadcast %cst_46 : f32 to vector<128x1xf32>
      %80 = arith.select %74, %78, %79 : vector<128x1xi1>, vector<128x1xf32>
      %cst_47 = arith.constant -1.000000e+00 : f32
      %81 = vector.broadcast %cst_47 : f32 to vector<128x1xf32>
      %82 = arith.mulf %81, %80 : vector<128x1xf32>
      %c0_48 = arith.constant 0 : index
      %c0_49 = arith.constant 0 : index
      %83 = vector.load %arg6[%c0_48, %c0_49] : memref<128x1xf32, #tpu.memory_space<vmem>>, vector<128x1xf32>
      tpu.vector_store %arg6[%c0_48, %c0_49], %82 {strides = array<i32>} : memref<128x1xf32, #tpu.memory_space<vmem>>, vector<128x1xf32>,
    } else {
    }
    return
  }
  func.func @transform_0(%arg0: i32, %arg1: i32) -> (i32, i32) {
    %c0_i32 = arith.constant 0 : i32
    %c0_i32_0 = arith.constant 0 : i32
    return %arg0, %c0_i32 : i32, i32
  }
  func.func @transform_1(%arg0: i32, %arg1: i32) -> (i32, i32) {
    %c0_i32 = arith.constant 0 : i32
    %c0_i32_0 = arith.constant 0 : i32
    return %c0_i32, %arg1 : i32, i32
  }
  func.func @transform_2(%arg0: i32, %arg1: i32) -> (i32, i32) {
    %c0_i32 = arith.constant 0 : i32
    %c0_i32_0 = arith.constant 0 : i32
    return %arg0, %c0_i32 : i32, i32
  }
  func.func @transform_3(%arg0: i32, %arg1: i32) -> (i32, i32) {
    %c0_i32 = arith.constant 0 : i32
    %c0_i32_0 = arith.constant 0 : i32
    return %arg1, %c0_i32 : i32, i32
  }
  func.func @transform_4(%arg0: i32, %arg1: i32) -> (i32, i32) {
    %c0_i32 = arith.constant 0 : i32
    %c0_i32_0 = arith.constant 0 : i32
    return %arg0, %c0_i32 : i32, i32
  }
}

</mosaic_0001>

<llo_original>
// kernel: tpu_custom_call.1
$region0: #{tpu_custom_call.1}
  #allocation0 [shape = 'u32[]', space=smem, size = 0x4, offset = 0x4, fixed_abs, tag = 'smem constant byte address 0x4 - core index']
  #allocation1 [shape = 'u32[144,128]{1,0:T(1,128)}', space=vmem, size = 0x12000, scoped, tag = 'internal scratch']
  #allocation2 [shape = 'f32[128,1]{1,0:T(8,128)}', space=vmem, size = 0x10000, scoped, tag = 'scratch operand']
  #allocation3 [shape = 'f32[128,1]{1,0:T(8,128)}', space=vmem, size = 0x10000, scoped, tag = 'scratch operand']
  #allocation4 [shape = 'f32[128,1]{1,0:T(8,128)}', space=vmem, size = 0x10000, scoped, tag = 'scratch operand']
  #allocation5 [shape = 'f32[128,1]{1,0:T(8,128)}', space=vmem, size = 0x10000, scoped, tag = 'scratch operand']
  %s0 = inlined_call_operand.vmem [shape: s32[128,1], index: 0, kind: input, shape index: {}]
  %s1 = inlined_call_operand.vmem [shape: s32[1,128], index: 1, kind: input, shape index: {}]
  %s2 = inlined_call_operand.vmem [shape: f32[128,128], index: 2, kind: input, shape index: {}]
  %s3 = inlined_call_operand.hbm [shape: f32[128,128], index: 3, kind: input, shape index: {}]
  %s4 = inlined_call_operand.vmem [shape: f32[128,1], index: 4, kind: output, shape index: {}]
  %s5 = sld [smem:[#allocation0]]
  $region38: #{tpu_custom_call.1} parent=0
    _
  %s7 = ssub.s32 1, %s5
  %s8 = scalar_select 0, %s7, %s5
  $region1: #{tpu_custom_call.1} parent=0
    #allocation6 [shape = 'u8[65536]{0}', space=vmem, size = 0x10000, scoped, tag = 'input window, operand 3, single buffered']
    #allocation7 [shape = 's32[1]{0}', space=sflag, size = 0x4, scoped, tag = 'scoped memory for tpu_custom_call.1']
    %9 = vsyncpa [#allocation7], 0
    // Predicated region
    $region2: #{tpu_custom_call.1} parent=1 // pred_check
      _
    $region3: #{tpu_custom_call.1} parent=1 // pred_check_branch
      %11 = sbr.rel (0) target = $region5
    $region4: #{tpu_custom_call.1} parent=1 // pred_region
      _
    $region5: #{tpu_custom_call.1} parent=1 // pred_fallthru
      _
    // Predicated region
    $region6: #{tpu_custom_call.1} parent=1 // pred_check
      _
    $region7: #{tpu_custom_call.1} parent=1 // pred_check_branch
      %13 = sbr.rel (0) target = $region9
    $region8: #{tpu_custom_call.1} parent=1 // pred_region
      _
    $region9: #{tpu_custom_call.1} parent=1 // pred_fallthru
      _
    // Predicated region
    $region10: #{tpu_custom_call.1} parent=1 // pred_check
      _
    $region11: #{tpu_custom_call.1} parent=1 // pred_check_branch
      %15 = sbr.rel (0) target = $region13
    $region12: #{tpu_custom_call.1} parent=1 // pred_region
      _
    $region13: #{tpu_custom_call.1} parent=1 // pred_fallthru
      _
    // Predicated region
    $region14: #{tpu_custom_call.1} parent=1 // pred_check
      _
    $region15: #{tpu_custom_call.1} parent=1 // pred_check_branch
      %17 = sbr.rel (0) target = $region17
    $region16: #{tpu_custom_call.1} parent=1 // pred_region
      %s19 = ssub.s32 2048, 2048
      %20 = vsyncadd [#allocation7], %s19
      %s21 = sshll.u32 [#allocation6], 4
      %s22 = int_to_ptr.vmem [resolvable:$true] %s21
      %27 = dma.hbm_to_vmem [thread:$0]  %s3, 2048, %s22, [#allocation7], 128, 128, 8
    $region17: #{tpu_custom_call.1} parent=1 // pred_fallthru
      _
    // Predicated region
    $region18: #{tpu_custom_call.1} parent=1 // pred_check
      _
    $region19: #{tpu_custom_call.1} parent=1 // pred_check_branch
      %29 = sbr.rel (0) target = $region21
    $region20: #{tpu_custom_call.1} parent=1 // pred_region
      %30 = dma.done [#allocation7], 2048
    $region21: #{tpu_custom_call.1} parent=1 // pred_fallthru
      _
    %p31 = scmp.eq.s32.totalorder 0, 0
    // Predicated region
    $region22: #{tpu_custom_call.1} parent=1 // pred_check
      %p32 = pneg %p31
    $region23: #{tpu_custom_call.1} parent=1 // pred_check_branch
      %34 = sbr.rel (%p32) target = $region25
    $region24: #{tpu_custom_call.1} parent=1 // pred_region
      %vm35 = vcmask 7168
      %36 = vst.msk [vmem:[#allocation2] sm:$0xff] %vm35, -inf
      %37 = vst.msk [vmem:[#allocation2 + $0x8] sm:$0xff] %vm35, -inf
      %38 = vst.msk [vmem:[#allocation2 + $0x10] sm:$0xff] %vm35, -inf
      %39 = vst.msk [vmem:[#allocation2 + $0x18] sm:$0xff] %vm35, -inf
      %40 = vst.msk [vmem:[#allocation2 + $0x20] sm:$0xff] %vm35, -inf
      %41 = vst.msk [vmem:[#allocation2 + $0x28] sm:$0xff] %vm35, -inf
      %42 = vst.msk [vmem:[#allocation2 + $0x30] sm:$0xff] %vm35, -inf
      %43 = vst.msk [vmem:[#allocation2 + $0x38] sm:$0xff] %vm35, -inf
      %44 = vst.msk [vmem:[#allocation2 + $0x40] sm:$0xff] %vm35, -inf
      %45 = vst.msk [vmem:[#allocation2 + $0x48] sm:$0xff] %vm35, -inf
      %46 = vst.msk [vmem:[#allocation2 + $0x50] sm:$0xff] %vm35, -inf
      %47 = vst.msk [vmem:[#allocation2 + $0x58] sm:$0xff] %vm35, -inf
      %48 = vst.msk [vmem:[#allocation2 + $0x60] sm:$0xff] %vm35, -inf
      %49 = vst.msk [vmem:[#allocation2 + $0x68] sm:$0xff] %vm35, -inf
      %50 = vst.msk [vmem:[#allocation2 + $0x70] sm:$0xff] %vm35, -inf
      %51 = vst.msk [vmem:[#allocation2 + $0x78] sm:$0xff] %vm35, -inf
      %52 = vst.msk [vmem:[#allocation3] sm:$0xff] %vm35, 0.0
      %53 = vst.msk [vmem:[#allocation3 + $0x8] sm:$0xff] %vm35, 0.0
      %54 = vst.msk [vmem:[#allocation3 + $0x10] sm:$0xff] %vm35, 0.0
      %55 = vst.msk [vmem:[#allocation3 + $0x18] sm:$0xff] %vm35, 0.0
      %56 = vst.msk [vmem:[#allocation3 + $0x20] sm:$0xff] %vm35, 0.0
      %57 = vst.msk [vmem:[#allocation3 + $0x28] sm:$0xff] %vm35, 0.0
      %58 = vst.msk [vmem:[#allocation3 + $0x30] sm:$0xff] %vm35, 0.0
      %59 = vst.msk [vmem:[#allocation3 + $0x38] sm:$0xff] %vm35, 0.0
      %60 = vst.msk [vmem:[#allocation3 + $0x40] sm:$0xff] %vm35, 0.0
      %61 = vst.msk [vmem:[#allocation3 + $0x48] sm:$0xff] %vm35, 0.0
      %62 = vst.msk [vmem:[#allocation3 + $0x50] sm:$0xff] %vm35, 0.0
      %63 = vst.msk [vmem:[#allocation3 + $0x58] sm:$0xff] %vm35, 0.0
      %64 = vst.msk [vmem:[#allocation3 + $0x60] sm:$0xff] %vm35, 0.0
      %65 = vst.msk [vmem:[#allocation3 + $0x68] sm:$0xff] %vm35, 0.0
      %66 = vst.msk [vmem:[#allocation3 + $0x70] sm:$0xff] %vm35, 0.0
      %67 = vst.msk [vmem:[#allocation3 + $0x78] sm:$0xff] %vm35, 0.0
      %68 = vst.msk [vmem:[#allocation4] sm:$0xff] %vm35, 0.0
      %69 = vst.msk [vmem:[#allocation4 + $0x8] sm:$0xff] %vm35, 0.0
      %70 = vst.msk [vmem:[#allocation4 + $0x10] sm:$0xff] %vm35, 0.0
      %71 = vst.msk [vmem:[#allocation4 + $0x18] sm:$0xff] %vm35, 0.0
      %72 = vst.msk [vmem:[#allocation4 + $0x20] sm:$0xff] %vm35, 0.0
      %73 = vst.msk [vmem:[#allocation4 + $0x28] sm:$0xff] %vm35, 0.0
      %74 = vst.msk [vmem:[#allocation4 + $0x30] sm:$0xff] %vm35, 0.0
      %75 = vst.msk [vmem:[#allocation4 + $0x38] sm:$0xff] %vm35, 0.0
      %76 = vst.msk [vmem:[#allocation4 + $0x40] sm:$0xff] %vm35, 0.0
      %77 = vst.msk [vmem:[#allocation4 + $0x48] sm:$0xff] %vm35, 0.0
      %78 = vst.msk [vmem:[#allocation4 + $0x50] sm:$0xff] %vm35, 0.0
      %79 = vst.msk [vmem:[#allocation4 + $0x58] sm:$0xff] %vm35, 0.0
      %80 = vst.msk [vmem:[#allocation4 + $0x60] sm:$0xff] %vm35, 0.0
      %81 = vst.msk [vmem:[#allocation4 + $0x68] sm:$0xff] %vm35, 0.0
      %82 = vst.msk [vmem:[#allocation4 + $0x70] sm:$0xff] %vm35, 0.0
      %83 = vst.msk [vmem:[#allocation4 + $0x78] sm:$0xff] %vm35, 0.0
      %84 = vst.msk [vmem:[#allocation5] sm:$0xff] %vm35, 0.0
      %85 = vst.msk [vmem:[#allocation5 + $0x8] sm:$0xff] %vm35, 0.0
      %86 = vst.msk [vmem:[#allocation5 + $0x10] sm:$0xff] %vm35, 0.0
      %87 = vst.msk [vmem:[#allocation5 + $0x18] sm:$0xff] %vm35, 0.0
      %88 = vst.msk [vmem:[#allocation5 + $0x20] sm:$0xff] %vm35, 0.0
      %89 = vst.msk [vmem:[#allocation5 + $0x28] sm:$0xff] %vm35, 0.0
      %90 = vst.msk [vmem:[#allocation5 + $0x30] sm:$0xff] %vm35, 0.0
      %91 = vst.msk [vmem:[#allocation5 + $0x38] sm:$0xff] %vm35, 0.0
      %92 = vst.msk [vmem:[#allocation5 + $0x40] sm:$0xff] %vm35, 0.0
      %93 = vst.msk [vmem:[#allocation5 + $0x48] sm:$0xff] %vm35, 0.0
      %94 = vst.msk [vmem:[#allocation5 + $0x50] sm:$0xff] %vm35, 0.0
      %95 = vst.msk [vmem:[#allocation5 + $0x58] sm:$0xff] %vm35, 0.0
      %96 = vst.msk [vmem:[#allocation5 + $0x60] sm:$0xff] %vm35, 0.0
      %97 = vst.msk [vmem:[#allocation5 + $0x68] sm:$0xff] %vm35, 0.0
      %98 = vst.msk [vmem:[#allocation5 + $0x70] sm:$0xff] %vm35, 0.0
      %99 = vst.msk [vmem:[#allocation5 + $0x78] sm:$0xff] %vm35, 0.0
    $region25: #{tpu_custom_call.1} parent=1 // pred_fallthru
      _
    %v100 = vld [vmem:[%s2] sm:$0xff]
    %v101 = vld [vmem:[%s2 + $0x8] sm:$0xff]
    %v102 = vld [vmem:[%s2 + $0x10] sm:$0xff]
    %v103 = vld [vmem:[%s2 + $0x18] sm:$0xff]
    %v104 = vld [vmem:[%s2 + $0x20] sm:$0xff]
    %v105 = vld [vmem:[%s2 + $0x28] sm:$0xff]
    %v106 = vld [vmem:[%s2 + $0x30] sm:$0xff]
    %v107 = vld [vmem:[%s2 + $0x38] sm:$0xff]
    %v108 = vld [vmem:[%s2 + $0x40] sm:$0xff]
    %v109 = vld [vmem:[%s2 + $0x48] sm:$0xff]
    %v110 = vld [vmem:[%s2 + $0x50] sm:$0xff]
    %v111 = vld [vmem:[%s2 + $0x58] sm:$0xff]
    %v112 = vld [vmem:[%s2 + $0x60] sm:$0xff]
    %v113 = vld [vmem:[%s2 + $0x68] sm:$0xff]
    %v114 = vld [vmem:[%s2 + $0x70] sm:$0xff]
    %v115 = vld [vmem:[%s2 + $0x78] sm:$0xff]
    %v116 = vld [vmem:[#allocation6] sm:$0xff]
    %v117 = vld [vmem:[#allocation6 + $0x8] sm:$0xff]
    %v118 = vld [vmem:[#allocation6 + $0x10] sm:$0xff]
    %v119 = vld [vmem:[#allocation6 + $0x18] sm:$0xff]
    %v120 = vld [vmem:[#allocation6 + $0x20] sm:$0xff]
    %v121 = vld [vmem:[#allocation6 + $0x28] sm:$0xff]
    %v122 = vld [vmem:[#allocation6 + $0x30] sm:$0xff]
    %v123 = vld [vmem:[#allocation6 + $0x38] sm:$0xff]
    %v124 = vld [vmem:[#allocation6 + $0x40] sm:$0xff]
    %v125 = vld [vmem:[#allocation6 + $0x48] sm:$0xff]
    %v126 = vld [vmem:[#allocation6 + $0x50] sm:$0xff]
    %v127 = vld [vmem:[#allocation6 + $0x58] sm:$0xff]
    %v128 = vld [vmem:[#allocation6 + $0x60] sm:$0xff]
    %v129 = vld [vmem:[#allocation6 + $0x68] sm:$0xff]
    %v130 = vld [vmem:[#allocation6 + $0x70] sm:$0xff]
    %v131 = vld [vmem:[#allocation6 + $0x78] sm:$0xff]
    %132 = vmatprep.subr.mxu0 0.0
    %133 = vmatpush1.xpose.msra.mxu0 %v116
    %134 = vmatprep.subr.mxu0 0.0
    %135 = vmatpush1.xpose.msra.mxu0 %v117
    %136 = vmatprep.subr.mxu0 0.0
    %137 = vmatpush1.xpose.msra.mxu0 %v118
    %138 = vmatprep.subr.mxu0 0.0
    %139 = vmatpush1.xpose.msra.mxu0 %v119
    %140 = vmatprep.subr.mxu0 0.0
    %141 = vmatpush1.xpose.msra.mxu0 %v120
    %142 = vmatprep.subr.mxu0 0.0
    %143 = vmatpush1.xpose.msra.mxu0 %v121
    %144 = vmatprep.subr.mxu0 0.0
    %145 = vmatpush1.xpose.msra.mxu0 %v122
    %146 = vmatprep.subr.mxu0 0.0
    %147 = vmatpush1.xpose.msra.mxu0 %v123
    %148 = vmatprep.subr.mxu0 0.0
    %149 = vmatpush1.xpose.msra.mxu0 %v124
    %150 = vmatprep.subr.mxu0 0.0
    %151 = vmatpush1.xpose.msra.mxu0 %v125
    %152 = vmatprep.subr.mxu0 0.0
    %153 = vmatpush1.xpose.msra.mxu0 %v126
    %154 = vmatprep.subr.mxu0 0.0
    %155 = vmatpush1.xpose.msra.mxu0 %v127
    %156 = vmatprep.subr.mxu0 0.0
    %157 = vmatpush1.xpose.msra.mxu0 %v128
    %158 = vmatprep.subr.mxu0 0.0
    %159 = vmatpush1.xpose.msra.mxu0 %v129
    %160 = vmatprep.subr.mxu0 0.0
    %161 = vmatpush1.xpose.msra.mxu0 %v130
    %162 = vmatprep.subr.mxu0 0.0
    %163 = vmatpush1.xpose.msra.mxu0 %v131
    %164 = vmatprep.subr.mxu0 0.0
    %165 = vmatpush1.xpose.msra.mxu0 0.0
    %166 = vmatprep.subr.mxu0 0.0
    %167 = vmatpush1.xpose.msra.mxu0 0.0
    %168 = vmatprep.subr.mxu0 0.0
    %169 = vmatpush1.xpose.msra.mxu0 0.0
    %170 = vmatprep.subr.mxu0 0.0
    %171 = vmatpush1.xpose.msra.mxu0 0.0
    %172 = vmatprep.subr.mxu0 0.0
    %173 = vmatpush1.xpose.msra.mxu0 0.0
    %174 = vmatprep.subr.mxu0 0.0
    %175 = vmatpush1.xpose.msra.mxu0 0.0
    %176 = vmatprep.subr.mxu0 0.0
    %177 = vmatpush1.xpose.msra.mxu0 0.0
    %178 = vmatprep.subr.mxu0 0.0
    %179 = vmatpush1.xpose.msra.mxu0 0.0
    %180 = vmatprep.subr.mxu0 0.0
    %181 = vmatpush1.xpose.msra.mxu0 0.0
    %182 = vmatprep.subr.mxu0 0.0
    %183 = vmatpush1.xpose.msra.mxu0 0.0
    %184 = vmatprep.subr.mxu0 0.0
    %185 = vmatpush1.xpose.msra.mxu0 0.0
    %186 = vmatprep.subr.mxu0 0.0
    %187 = vmatpush1.xpose.msra.mxu0 0.0
    %188 = vmatprep.subr.mxu0 0.0
    %189 = vmatpush1.xpose.msra.mxu0 0.0
    %190 = vmatprep.subr.mxu0 0.0
    %191 = vmatpush1.xpose.msra.mxu0 0.0
    %192 = vmatprep.subr.mxu0 0.0
    %193 = vmatpush1.xpose.msra.mxu0 0.0
    %194 = vmatprep.subr.mxu0 0.0
    %195 = vmatpush1.xpose.msra.mxu0 0.0
    %196 = vmatprep.mubr.f32.mxu0 0.0
    %197 = vmatmul.mubr.f32.gmra.mrb[0].mxu0 %v100
    %v198 = vpop.f32.mrb[0].mxu0
    %v199 = vadd.f32 0.0, %v198
    %v200 = vpop.f32.mrb[0].mxu0
    %201 = vmatprep.mubr.f32.mxu0 0.0
    %202 = vmatmul.mubr.f32.gmra.mrb[0].mxu0 %v101
    %v203 = vpop.f32.mrb[0].mxu0
    %v204 = vadd.f32 0.0, %v203
    %v205 = vpop.f32.mrb[0].mxu0
    %206 = vmatprep.mubr.f32.mxu0 0.0
    %207 = vmatmul.mubr.f32.gmra.mrb[0].mxu0 %v102
    %v208 = vpop.f32.mrb[0].mxu0
    %v209 = vadd.f32 0.0, %v208
    %v210 = vpop.f32.mrb[0].mxu0
    %211 = vmatprep.mubr.f32.mxu0 0.0
    %212 = vmatmul.mubr.f32.gmra.mrb[0].mxu0 %v103
    %v213 = vpop.f32.mrb[0].mxu0
    %v214 = vadd.f32 0.0, %v213
    %v215 = vpop.f32.mrb[0].mxu0
    %216 = vmatprep.mubr.f32.mxu0 0.0
    %217 = vmatmul.mubr.f32.gmra.mrb[0].mxu0 %v104
    %v218 = vpop.f32.mrb[0].mxu0
    %v219 = vadd.f32 0.0, %v218
    %v220 = vpop.f32.mrb[0].mxu0
    %221 = vmatprep.mubr.f32.mxu0 0.0
    %222 = vmatmul.mubr.f32.gmra.mrb[0].mxu0 %v105
    %v223 = vpop.f32.mrb[0].mxu0
    %v224 = vadd.f32 0.0, %v223
    %v225 = vpop.f32.mrb[0].mxu0
    %226 = vmatprep.mubr.f32.mxu0 0.0
    %227 = vmatmul.mubr.f32.gmra.mrb[0].mxu0 %v106
    %v228 = vpop.f32.mrb[0].mxu0
    %v229 = vadd.f32 0.0, %v228
    %v230 = vpop.f32.mrb[0].mxu0
    %231 = vmatprep.mubr.f32.mxu0 0.0
    %232 = vmatmul.mubr.f32.gmra.mrb[0].mxu0 %v107
    %v233 = vpop.f32.mrb[0].mxu0
    %v234 = vadd.f32 0.0, %v233
    %v235 = vpop.f32.mrb[0].mxu0
    %236 = vmatprep.mubr.f32.mxu0 0.0
    %237 = vmatmul.mubr.f32.gmra.mrb[0].mxu0 %v108
    %v238 = vpop.f32.mrb[0].mxu0
    %v239 = vadd.f32 0.0, %v238
    %v240 = vpop.f32.mrb[0].mxu0
    %241 = vmatprep.mubr.f32.mxu0 0.0
    %242 = vmatmul.mubr.f32.gmra.mrb[0].mxu0 %v109
    %v243 = vpop.f32.mrb[0].mxu0
    %v244 = vadd.f32 0.0, %v243
    %v245 = vpop.f32.mrb[0].mxu0
    %246 = vmatprep.mubr.f32.mxu0 0.0
    %247 = vmatmul.mubr.f32.gmra.mrb[0].mxu0 %v110
    %v248 = vpop.f32.mrb[0].mxu0
    %v249 = vadd.f32 0.0, %v248
    %v250 = vpop.f32.mrb[0].mxu0
    %251 = vmatprep.mubr.f32.mxu0 0.0
    %252 = vmatmul.mubr.f32.gmra.mrb[0].mxu0 %v111
    %v253 = vpop.f32.mrb[0].mxu0
    %v254 = vadd.f32 0.0, %v253
    %v255 = vpop.f32.mrb[0].mxu0
    %256 = vmatprep.mubr.f32.mxu0 0.0
    %257 = vmatmul.mubr.f32.gmra.mrb[0].mxu0 %v112
    %v258 = vpop.f32.mrb[0].mxu0
    %v259 = vadd.f32 0.0, %v258
    %v260 = vpop.f32.mrb[0].mxu0
    %261 = vmatprep.mubr.f32.mxu0 0.0
    %262 = vmatmul.mubr.f32.gmra.mrb[0].mxu0 %v113
    %v263 = vpop.f32.mrb[0].mxu0
    %v264 = vadd.f32 0.0, %v263
    %v265 = vpop.f32.mrb[0].mxu0
    %266 = vmatprep.mubr.f32.mxu0 0.0
    %267 = vmatmul.mubr.f32.gmra.mrb[0].mxu0 %v114
    %v268 = vpop.f32.mrb[0].mxu0
    %v269 = vadd.f32 0.0, %v268
    %v270 = vpop.f32.mrb[0].mxu0
    %271 = vmatprep.mubr.f32.mxu0 0.0
    %272 = vmatmul.mubr.f32.gmra.mrb[0].mxu0 %v115
    %v273 = vpop.f32.mrb[0].mxu0
    %v274 = vadd.f32 0.0, %v273
    %v275 = vpop.f32.mrb[0].mxu0
    %276 = vdwg.mxu0
    %v277 = vmul.f32 %v199, 14.285714
    %v278 = vmul.f32 %v204, 14.285714
    %v279 = vmul.f32 %v209, 14.285714
    %v280 = vmul.f32 %v214, 14.285714
    %v281 = vmul.f32 %v219, 14.285714
    %v282 = vmul.f32 %v224, 14.285714
    %v283 = vmul.f32 %v229, 14.285714
    %v284 = vmul.f32 %v234, 14.285714
    %v285 = vmul.f32 %v239, 14.285714
    %v286 = vmul.f32 %v244, 14.285714
    %v287 = vmul.f32 %v249, 14.285714
    %v288 = vmul.f32 %v254, 14.285714
    %v289 = vmul.f32 %v259, 14.285714
    %v290 = vmul.f32 %v264, 14.285714
    %v291 = vmul.f32 %v269, 14.285714
    %v292 = vmul.f32 %v274, 14.285714
    %s293 = smul.u32 0, 128
    %v294 = vlaneseq
    %v295 = vshrl.u32 %v294, 7
    %v296 = vadd.s32 %v295, 8
    %v297 = vadd.s32 %v295, 16
    %v298 = vadd.s32 %v295, 24
    %v299 = vadd.s32 %v295, 32
    %v300 = vadd.s32 %v295, 40
    %v301 = vadd.s32 %v295, 48
    %v302 = vadd.s32 %v295, 56
    %v303 = vadd.s32 %v295, 64
    %v304 = vadd.s32 %v295, 72
    %v305 = vadd.s32 %v295, 80
    %v306 = vadd.s32 %v295, 88
    %v307 = vadd.s32 %v295, 96
    %v308 = vadd.s32 %v295, 104
    %v309 = vadd.s32 %v295, 112
    %v310 = vadd.s32 %v295, 120
    %v311 = vstv %s293
    %v312 = vadd.s32 %v311, %v295
    %v313 = vadd.s32 %v311, %v296
    %v314 = vadd.s32 %v311, %v297
    %v315 = vadd.s32 %v311, %v298
    %v316 = vadd.s32 %v311, %v299
    %v317 = vadd.s32 %v311, %v300
    %v318 = vadd.s32 %v311, %v301
    %v319 = vadd.s32 %v311, %v302
    %v320 = vadd.s32 %v311, %v303
    %v321 = vadd.s32 %v311, %v304
    %v322 = vadd.s32 %v311, %v305
    %v323 = vadd.s32 %v311, %v306
    %v324 = vadd.s32 %v311, %v307
    %v325 = vadd.s32 %v311, %v308
    %v326 = vadd.s32 %v311, %v309
    %v327 = vadd.s32 %v311, %v310
    %s328 = smul.u32 0, 128
    %v329 = vlaneseq
    %v330 = vand.u32 %v329, 127
    %v331 = vstv %s328
    %v332 = vadd.s32 %v331, %v330
    %vm333 = vcmp.lt.s32.totalorder %v332, 16
    %vm334 = vcmp.ne.s32.totalorder %v312, %v332
    %vm335 = vcmp.ne.s32.totalorder %v313, %v332
    %vm336 = vcmp.ne.s32.totalorder %v314, %v332
    %vm337 = vcmp.ne.s32.totalorder %v315, %v332
    %vm338 = vcmp.ne.s32.totalorder %v316, %v332
    %vm339 = vcmp.ne.s32.totalorder %v317, %v332
    %vm340 = vcmp.ne.s32.totalorder %v318, %v332
    %vm341 = vcmp.ne.s32.totalorder %v319, %v332
    %vm342 = vcmp.ne.s32.totalorder %v320, %v332
    %vm343 = vcmp.ne.s32.totalorder %v321, %v332
    %vm344 = vcmp.ne.s32.totalorder %v322, %v332
    %vm345 = vcmp.ne.s32.totalorder %v323, %v332
    %vm346 = vcmp.ne.s32.totalorder %v324, %v332
    %vm347 = vcmp.ne.s32.totalorder %v325, %v332
    %vm348 = vcmp.ne.s32.totalorder %v326, %v332
    %vm349 = vcmp.ne.s32.totalorder %v327, %v332
    %vm350 = vmand %vm334, %vm333
    %vm351 = vmand %vm335, %vm333
    %vm352 = vmand %vm336, %vm333
    %vm353 = vmand %vm337, %vm333
    %vm354 = vmand %vm338, %vm333
    %vm355 = vmand %vm339, %vm333
    %vm356 = vmand %vm340, %vm333
    %vm357 = vmand %vm341, %vm333
    %vm358 = vmand %vm342, %vm333
    %vm359 = vmand %vm343, %vm333
    %vm360 = vmand %vm344, %vm333
    %vm361 = vmand %vm345, %vm333
    %vm362 = vmand %vm346, %vm333
    %vm363 = vmand %vm347, %vm333
    %vm364 = vmand %vm348, %vm333
    %vm365 = vmand %vm349, %vm333
    %v366 = vld [vmem:[%s0] sm:$0xff]
    %v367 = vld [vmem:[%s0 + $0x8] sm:$0xff]
    %v368 = vld [vmem:[%s0 + $0x10] sm:$0xff]
    %v369 = vld [vmem:[%s0 + $0x18] sm:$0xff]
    %v370 = vld [vmem:[%s0 + $0x20] sm:$0xff]
    %v371 = vld [vmem:[%s0 + $0x28] sm:$0xff]
    %v372 = vld [vmem:[%s0 + $0x30] sm:$0xff]
    %v373 = vld [vmem:[%s0 + $0x38] sm:$0xff]
    %v374 = vld [vmem:[%s0 + $0x40] sm:$0xff]
    %v375 = vld [vmem:[%s0 + $0x48] sm:$0xff]
    %v376 = vld [vmem:[%s0 + $0x50] sm:$0xff]
    %v377 = vld [vmem:[%s0 + $0x58] sm:$0xff]
    %v378 = vld [vmem:[%s0 + $0x60] sm:$0xff]
    %v379 = vld [vmem:[%s0 + $0x68] sm:$0xff]
    %v380 = vld [vmem:[%s0 + $0x70] sm:$0xff]
    %v381 = vld [vmem:[%s0 + $0x78] sm:$0xff]
    %v382 = vld [vmem:[%s1] sm:$0x1]
    %383 = vset.pattern.permute.xlu0 0
    %384 = vperm.xlu0 %383, %v366
    %v385 = vpop.permute.xlu0 %384
    %386 = vset.pattern.permute.xlu0 0
    %387 = vperm.xlu0 %386, %v367
    %v388 = vpop.permute.xlu0 %387
    %389 = vset.pattern.permute.xlu0 0
    %390 = vperm.xlu0 %389, %v368
    %v391 = vpop.permute.xlu0 %390
    %392 = vset.pattern.permute.xlu0 0
    %393 = vperm.xlu0 %392, %v369
    %v394 = vpop.permute.xlu0 %393
    %395 = vset.pattern.permute.xlu0 0
    %396 = vperm.xlu0 %395, %v370
    %v397 = vpop.permute.xlu0 %396
    %398 = vset.pattern.permute.xlu0 0
    %399 = vperm.xlu0 %398, %v371
    %v400 = vpop.permute.xlu0 %399
    %401 = vset.pattern.permute.xlu0 0
    %402 = vperm.xlu0 %401, %v372
    %v403 = vpop.permute.xlu0 %402
    %404 = vset.pattern.permute.xlu0 0
    %405 = vperm.xlu0 %404, %v373
    %v406 = vpop.permute.xlu0 %405
    %407 = vset.pattern.permute.xlu0 0
    %408 = vperm.xlu0 %407, %v374
    %v409 = vpop.permute.xlu0 %408
    %410 = vset.pattern.permute.xlu0 0
    %411 = vperm.xlu0 %410, %v375
    %v412 = vpop.permute.xlu0 %411
    %413 = vset.pattern.permute.xlu0 0
    %414 = vperm.xlu0 %413, %v376
    %v415 = vpop.permute.xlu0 %414
    %416 = vset.pattern.permute.xlu0 0
    %417 = vperm.xlu0 %416, %v377
    %v418 = vpop.permute.xlu0 %417
    %419 = vset.pattern.permute.xlu0 0
    %420 = vperm.xlu0 %419, %v378
    %v421 = vpop.permute.xlu0 %420
    %422 = vset.pattern.permute.xlu0 0
    %423 = vperm.xlu0 %422, %v379
    %v424 = vpop.permute.xlu0 %423
    %425 = vset.pattern.permute.xlu0 0
    %426 = vperm.xlu0 %425, %v380
    %v427 = vpop.permute.xlu0 %426
    %428 = vset.pattern.permute.xlu0 0
    %429 = vperm.xlu0 %428, %v381
    %v430 = vpop.permute.xlu0 %429
    %v431 = vlaneseq
    %v432 = vshrl.u32 %v431, 7
    %v433 = vsub.s32 0, %v432
    %v434 = vrot.slane %v382, %v433
    %vm435 = vcmp.eq.s32.totalorder %v385, %v434
    %vm436 = vcmp.eq.s32.totalorder %v388, %v434
    %vm437 = vcmp.eq.s32.totalorder %v391, %v434
    %vm438 = vcmp.eq.s32.totalorder %v394, %v434
    %vm439 = vcmp.eq.s32.totalorder %v397, %v434
    %vm440 = vcmp.eq.s32.totalorder %v400, %v434
    %vm441 = vcmp.eq.s32.totalorder %v403, %v434
    %vm442 = vcmp.eq.s32.totalorder %v406, %v434
    %vm443 = vcmp.eq.s32.totalorder %v409, %v434
    %vm444 = vcmp.eq.s32.totalorder %v412, %v434
    %vm445 = vcmp.eq.s32.totalorder %v415, %v434
    %vm446 = vcmp.eq.s32.totalorder %v418, %v434
    %vm447 = vcmp.eq.s32.totalorder %v421, %v434
    %vm448 = vcmp.eq.s32.totalorder %v424, %v434
    %vm449 = vcmp.eq.s32.totalorder %v427, %v434
    %vm450 = vcmp.eq.s32.totalorder %v430, %v434
    %vm451 = vmand %vm435, %vm350
    %vm452 = vmand %vm436, %vm351
    %vm453 = vmand %vm437, %vm352
    %vm454 = vmand %vm438, %vm353
    %vm455 = vmand %vm439, %vm354
    %vm456 = vmand %vm440, %vm355
    %vm457 = vmand %vm441, %vm356
    %vm458 = vmand %vm442, %vm357
    %vm459 = vmand %vm443, %vm358
    %vm460 = vmand %vm444, %vm359
    %vm461 = vmand %vm445, %vm360
    %vm462 = vmand %vm446, %vm361
    %vm463 = vmand %vm447, %vm362
    %vm464 = vmand %vm448, %vm363
    %vm465 = vmand %vm449, %vm364
    %vm466 = vmand %vm450, %vm365
    %v467 = vsel %vm350, 1, 0
    %v468 = vsel %vm351, 1, 0
    %v469 = vsel %vm352, 1, 0
    %v470 = vsel %vm353, 1, 0
    %v471 = vsel %vm354, 1, 0
    %v472 = vsel %vm355, 1, 0
    %v473 = vsel %vm356, 1, 0
    %v474 = vsel %vm357, 1, 0
    %v475 = vsel %vm358, 1, 0
    %v476 = vsel %vm359, 1, 0
    %v477 = vsel %vm360, 1, 0
    %v478 = vsel %vm361, 1, 0
    %v479 = vsel %vm362, 1, 0
    %v480 = vsel %vm363, 1, 0
    %v481 = vsel %vm364, 1, 0
    %v482 = vsel %vm365, 1, 0
    %v483 = vcvt.s32.f32 %v467
    %v484 = vcvt.s32.f32 %v468
    %v485 = vcvt.s32.f32 %v469
    %v486 = vcvt.s32.f32 %v470
    %v487 = vcvt.s32.f32 %v471
    %v488 = vcvt.s32.f32 %v472
    %v489 = vcvt.s32.f32 %v473
    %v490 = vcvt.s32.f32 %v474
    %v491 = vcvt.s32.f32 %v475
    %v492 = vcvt.s32.f32 %v476
    %v493 = vcvt.s32.f32 %v477
    %v494 = vcvt.s32.f32 %v478
    %v495 = vcvt.s32.f32 %v479
    %v496 = vcvt.s32.f32 %v480
    %v497 = vcvt.s32.f32 %v481
    %v498 = vcvt.s32.f32 %v482
    %v499 = vsel %vm451, 1, 0
    %v500 = vsel %vm452, 1, 0
    %v501 = vsel %vm453, 1, 0
    %v502 = vsel %vm454, 1, 0
    %v503 = vsel %vm455, 1, 0
    %v504 = vsel %vm456, 1, 0
    %v505 = vsel %vm457, 1, 0
    %v506 = vsel %vm458, 1, 0
    %v507 = vsel %vm459, 1, 0
    %v508 = vsel %vm460, 1, 0
    %v509 = vsel %vm461, 1, 0
    %v510 = vsel %vm462, 1, 0
    %v511 = vsel %vm463, 1, 0
    %v512 = vsel %vm464, 1, 0
    %v513 = vsel %vm465, 1, 0
    %v514 = vsel %vm466, 1, 0
    %v515 = vcvt.s32.f32 %v499
    %v516 = vcvt.s32.f32 %v500
    %v517 = vcvt.s32.f32 %v501
    %v518 = vcvt.s32.f32 %v502
    %v519 = vcvt.s32.f32 %v503
    %v520 = vcvt.s32.f32 %v504
    %v521 = vcvt.s32.f32 %v505
    %v522 = vcvt.s32.f32 %v506
    %v523 = vcvt.s32.f32 %v507
    %v524 = vcvt.s32.f32 %v508
    %v525 = vcvt.s32.f32 %v509
    %v526 = vcvt.s32.f32 %v510
    %v527 = vcvt.s32.f32 %v511
    %v528 = vcvt.s32.f32 %v512
    %v529 = vcvt.s32.f32 %v513
    %v530 = vcvt.s32.f32 %v514
    %v531 = vsel %vm333, %v277, -inf
    %v532 = vsel %vm333, %v278, -inf
    %v533 = vsel %vm333, %v279, -inf
    %v534 = vsel %vm333, %v280, -inf
    %v535 = vsel %vm333, %v281, -inf
    %v536 = vsel %vm333, %v282, -inf
    %v537 = vsel %vm333, %v283, -inf
    %v538 = vsel %vm333, %v284, -inf
    %v539 = vsel %vm333, %v285, -inf
    %v540 = vsel %vm333, %v286, -inf
    %v541 = vsel %vm333, %v287, -inf
    %v542 = vsel %vm333, %v288, -inf
    %v543 = vsel %vm333, %v289, -inf
    %v544 = vsel %vm333, %v290, -inf
    %v545 = vsel %vm333, %v291, -inf
    %v546 = vsel %vm333, %v292, -inf
    %v547 = vld [vmem:[#allocation2] sm:$0xff]
    %v548 = vld [vmem:[#allocation2 + $0x8] sm:$0xff]
    %v549 = vld [vmem:[#allocation2 + $0x10] sm:$0xff]
    %v550 = vld [vmem:[#allocation2 + $0x18] sm:$0xff]
    %v551 = vld [vmem:[#allocation2 + $0x20] sm:$0xff]
    %v552 = vld [vmem:[#allocation2 + $0x28] sm:$0xff]
    %v553 = vld [vmem:[#allocation2 + $0x30] sm:$0xff]
    %v554 = vld [vmem:[#allocation2 + $0x38] sm:$0xff]
    %v555 = vld [vmem:[#allocation2 + $0x40] sm:$0xff]
    %v556 = vld [vmem:[#allocation2 + $0x48] sm:$0xff]
    %v557 = vld [vmem:[#allocation2 + $0x50] sm:$0xff]
    %v558 = vld [vmem:[#allocation2 + $0x58] sm:$0xff]
    %v559 = vld [vmem:[#allocation2 + $0x60] sm:$0xff]
    %v560 = vld [vmem:[#allocation2 + $0x68] sm:$0xff]
    %v561 = vld [vmem:[#allocation2 + $0x70] sm:$0xff]
    %v562 = vld [vmem:[#allocation2 + $0x78] sm:$0xff]
    %563 = vmax.xlane.f32.xlu0 %v531
    %v564 = vpop.xlane.xlu0 %563
    %565 = vmax.xlane.f32.xlu0 %v532
    %v566 = vpop.xlane.xlu0 %565
    %567 = vmax.xlane.f32.xlu0 %v533
    %v568 = vpop.xlane.xlu0 %567
    %569 = vmax.xlane.f32.xlu0 %v534
    %v570 = vpop.xlane.xlu0 %569
    %571 = vmax.xlane.f32.xlu0 %v535
    %v572 = vpop.xlane.xlu0 %571
    %573 = vmax.xlane.f32.xlu0 %v536
    %v574 = vpop.xlane.xlu0 %573
    %575 = vmax.xlane.f32.xlu0 %v537
    %v576 = vpop.xlane.xlu0 %575
    %577 = vmax.xlane.f32.xlu0 %v538
    %v578 = vpop.xlane.xlu0 %577
    %579 = vmax.xlane.f32.xlu0 %v539
    %v580 = vpop.xlane.xlu0 %579
    %581 = vmax.xlane.f32.xlu0 %v540
    %v582 = vpop.xlane.xlu0 %581
    %583 = vmax.xlane.f32.xlu0 %v541
    %v584 = vpop.xlane.xlu0 %583
    %585 = vmax.xlane.f32.xlu0 %v542
    %v586 = vpop.xlane.xlu0 %585
    %587 = vmax.xlane.f32.xlu0 %v543
    %v588 = vpop.xlane.xlu0 %587
    %589 = vmax.xlane.f32.xlu0 %v544
    %v590 = vpop.xlane.xlu0 %589
    %591 = vmax.xlane.f32.xlu0 %v545
    %v592 = vpop.xlane.xlu0 %591
    %593 = vmax.xlane.f32.xlu0 %v546
    %v594 = vpop.xlane.xlu0 %593
    %v595 = vmax.f32 %v547, %v564
    %v596 = vmax.f32 %v548, %v566
    %v597 = vmax.f32 %v549, %v568
    %v598 = vmax.f32 %v550, %v570
    %v599 = vmax.f32 %v551, %v572
    %v600 = vmax.f32 %v552, %v574
    %v601 = vmax.f32 %v553, %v576
    %v602 = vmax.f32 %v554, %v578
    %v603 = vmax.f32 %v555, %v580
    %v604 = vmax.f32 %v556, %v582
    %v605 = vmax.f32 %v557, %v584
    %v606 = vmax.f32 %v558, %v586
    %v607 = vmax.f32 %v559, %v588
    %v608 = vmax.f32 %v560, %v590
    %v609 = vmax.f32 %v561, %v592
    %v610 = vmax.f32 %v562, %v594
    %v611 = vsub.f32 %v547, %v595
    %v612 = vsub.f32 %v548, %v596
    %v613 = vsub.f32 %v549, %v597
    %v614 = vsub.f32 %v550, %v598
    %v615 = vsub.f32 %v551, %v599
    %v616 = vsub.f32 %v552, %v600
    %v617 = vsub.f32 %v553, %v601
    %v618 = vsub.f32 %v554, %v602
    %v619 = vsub.f32 %v555, %v603
    %v620 = vsub.f32 %v556, %v604
    %v621 = vsub.f32 %v557, %v605
    %v622 = vsub.f32 %v558, %v606
    %v623 = vsub.f32 %v559, %v607
    %v624 = vsub.f32 %v560, %v608
    %v625 = vsub.f32 %v561, %v609
    %v626 = vsub.f32 %v562, %v610
    %v627 = vmul.f32 %v611, 1.442695
    %v628 = vpow.pop %v627
    %v629 = vmul.f32 %v612, 1.442695
    %v630 = vpow.pop %v629
    %v631 = vmul.f32 %v613, 1.442695
    %v632 = vpow.pop %v631
    %v633 = vmul.f32 %v614, 1.442695
    %v634 = vpow.pop %v633
    %v635 = vmul.f32 %v615, 1.442695
    %v636 = vpow.pop %v635
    %v637 = vmul.f32 %v616, 1.442695
    %v638 = vpow.pop %v637
    %v639 = vmul.f32 %v617, 1.442695
    %v640 = vpow.pop %v639
    %v641 = vmul.f32 %v618, 1.442695
    %v642 = vpow.pop %v641
    %v643 = vmul.f32 %v619, 1.442695
    %v644 = vpow.pop %v643
    %v645 = vmul.f32 %v620, 1.442695
    %v646 = vpow.pop %v645
    %v647 = vmul.f32 %v621, 1.442695
    %v648 = vpow.pop %v647
    %v649 = vmul.f32 %v622, 1.442695
    %v650 = vpow.pop %v649
    %v651 = vmul.f32 %v623, 1.442695
    %v652 = vpow.pop %v651
    %v653 = vmul.f32 %v624, 1.442695
    %v654 = vpow.pop %v653
    %v655 = vmul.f32 %v625, 1.442695
    %v656 = vpow.pop %v655
    %v657 = vmul.f32 %v626, 1.442695
    %v658 = vpow.pop %v657
    %660 = vset.pattern.permute.xlu0 0
    %661 = vperm.xlu0 %660, %v595
    %v662 = vpop.permute.xlu0 %661
    %665 = vset.pattern.permute.xlu0 0
    %666 = vperm.xlu0 %665, %v596
    %v667 = vpop.permute.xlu0 %666
    %670 = vset.pattern.permute.xlu0 0
    %671 = vperm.xlu0 %670, %v597
    %v672 = vpop.permute.xlu0 %671
    %675 = vset.pattern.permute.xlu0 0
    %676 = vperm.xlu0 %675, %v598
    %v677 = vpop.permute.xlu0 %676
    %680 = vset.pattern.permute.xlu0 0
    %681 = vperm.xlu0 %680, %v599
    %v682 = vpop.permute.xlu0 %681
    %685 = vset.pattern.permute.xlu0 0
    %686 = vperm.xlu0 %685, %v600
    %v687 = vpop.permute.xlu0 %686
    %690 = vset.pattern.permute.xlu0 0
    %691 = vperm.xlu0 %690, %v601
    %v692 = vpop.permute.xlu0 %691
    %695 = vset.pattern.permute.xlu0 0
    %696 = vperm.xlu0 %695, %v602
    %v697 = vpop.permute.xlu0 %696
    %700 = vset.pattern.permute.xlu0 0
    %701 = vperm.xlu0 %700, %v603
    %v702 = vpop.permute.xlu0 %701
    %705 = vset.pattern.permute.xlu0 0
    %706 = vperm.xlu0 %705, %v604
    %v707 = vpop.permute.xlu0 %706
    %710 = vset.pattern.permute.xlu0 0
    %711 = vperm.xlu0 %710, %v605
    %v712 = vpop.permute.xlu0 %711
    %715 = vset.pattern.permute.xlu0 0
    %716 = vperm.xlu0 %715, %v606
    %v717 = vpop.permute.xlu0 %716
    %720 = vset.pattern.permute.xlu0 0
    %721 = vperm.xlu0 %720, %v607
    %v722 = vpop.permute.xlu0 %721
    %725 = vset.pattern.permute.xlu0 0
    %726 = vperm.xlu0 %725, %v608
    %v727 = vpop.permute.xlu0 %726
    %730 = vset.pattern.permute.xlu0 0
    %731 = vperm.xlu0 %730, %v609
    %v732 = vpop.permute.xlu0 %731
    %735 = vset.pattern.permute.xlu0 0
    %736 = vperm.xlu0 %735, %v610
    %v737 = vpop.permute.xlu0 %736
    %v739 = vsub.f32 %v277, %v662
    %v740 = vsub.f32 %v278, %v667
    %v741 = vsub.f32 %v279, %v672
    %v742 = vsub.f32 %v280, %v677
    %v743 = vsub.f32 %v281, %v682
    %v744 = vsub.f32 %v282, %v687
    %v745 = vsub.f32 %v283, %v692
    %v746 = vsub.f32 %v284, %v697
    %v747 = vsub.f32 %v285, %v702
    %v748 = vsub.f32 %v286, %v707
    %v749 = vsub.f32 %v287, %v712
    %v750 = vsub.f32 %v288, %v717
    %v751 = vsub.f32 %v289, %v722
    %v752 = vsub.f32 %v290, %v727
    %v753 = vsub.f32 %v291, %v732
    %v754 = vsub.f32 %v292, %v737
    %v755 = vmul.f32 %v739, 1.442695
    %v756 = vpow.pop %v755
    %v757 = vmul.f32 %v740, 1.442695
    %v758 = vpow.pop %v757
    %v759 = vmul.f32 %v741, 1.442695
    %v760 = vpow.pop %v759
    %v761 = vmul.f32 %v742, 1.442695
    %v762 = vpow.pop %v761
    %v763 = vmul.f32 %v743, 1.442695
    %v764 = vpow.pop %v763
    %v765 = vmul.f32 %v744, 1.442695
    %v766 = vpow.pop %v765
    %v767 = vmul.f32 %v745, 1.442695
    %v768 = vpow.pop %v767
    %v769 = vmul.f32 %v746, 1.442695
    %v770 = vpow.pop %v769
    %v771 = vmul.f32 %v747, 1.442695
    %v772 = vpow.pop %v771
    %v773 = vmul.f32 %v748, 1.442695
    %v774 = vpow.pop %v773
    %v775 = vmul.f32 %v749, 1.442695
    %v776 = vpow.pop %v775
    %v777 = vmul.f32 %v750, 1.442695
    %v778 = vpow.pop %v777
    %v779 = vmul.f32 %v751, 1.442695
    %v780 = vpow.pop %v779
    %v781 = vmul.f32 %v752, 1.442695
    %v782 = vpow.pop %v781
    %v783 = vmul.f32 %v753, 1.442695
    %v784 = vpow.pop %v783
    %v785 = vmul.f32 %v754, 1.442695
    %v786 = vpow.pop %v785
    %v787 = vmul.f32 %v756, %v483
    %v788 = vmul.f32 %v758, %v484
    %v789 = vmul.f32 %v760, %v485
    %v790 = vmul.f32 %v762, %v486
    %v791 = vmul.f32 %v764, %v487
    %v792 = vmul.f32 %v766, %v488
    %v793 = vmul.f32 %v768, %v489
    %v794 = vmul.f32 %v770, %v490
    %v795 = vmul.f32 %v772, %v491
    %v796 = vmul.f32 %v774, %v492
    %v797 = vmul.f32 %v776, %v493
    %v798 = vmul.f32 %v778, %v494
    %v799 = vmul.f32 %v780, %v495
    %v800 = vmul.f32 %v782, %v496
    %v801 = vmul.f32 %v784, %v497
    %v802 = vmul.f32 %v786, %v498
    %v803 = vld [vmem:[#allocation3] sm:$0xff]
    %v804 = vld [vmem:[#allocation3 + $0x8] sm:$0xff]
    %v805 = vld [vmem:[#allocation3 + $0x10] sm:$0xff]
    %v806 = vld [vmem:[#allocation3 + $0x18] sm:$0xff]
    %v807 = vld [vmem:[#allocation3 + $0x20] sm:$0xff]
    %v808 = vld [vmem:[#allocation3 + $0x28] sm:$0xff]
    %v809 = vld [vmem:[#allocation3 + $0x30] sm:$0xff]
    %v810 = vld [vmem:[#allocation3 + $0x38] sm:$0xff]
    %v811 = vld [vmem:[#allocation3 + $0x40] sm:$0xff]
    %v812 = vld [vmem:[#allocation3 + $0x48] sm:$0xff]
    %v813 = vld [vmem:[#allocation3 + $0x50] sm:$0xff]
    %v814 = vld [vmem:[#allocation3 + $0x58] sm:$0xff]
    %v815 = vld [vmem:[#allocation3 + $0x60] sm:$0xff]
    %v816 = vld [vmem:[#allocation3 + $0x68] sm:$0xff]
    %v817 = vld [vmem:[#allocation3 + $0x70] sm:$0xff]
    %v818 = vld [vmem:[#allocation3 + $0x78] sm:$0xff]
    %v819 = vmul.f32 %v628, %v803
    %v820 = vmul.f32 %v630, %v804
    %v821 = vmul.f32 %v632, %v805
    %v822 = vmul.f32 %v634, %v806
    %v823 = vmul.f32 %v636, %v807
    %v824 = vmul.f32 %v638, %v808
    %v825 = vmul.f32 %v640, %v809
    %v826 = vmul.f32 %v642, %v810
    %v827 = vmul.f32 %v644, %v811
    %v828 = vmul.f32 %v646, %v812
    %v829 = vmul.f32 %v648, %v813
    %v830 = vmul.f32 %v650, %v814
    %v831 = vmul.f32 %v652, %v815
    %v832 = vmul.f32 %v654, %v816
    %v833 = vmul.f32 %v656, %v817
    %v834 = vmul.f32 %v658, %v818
    %835 = vadd.xlane.f32.xlu0 %v787
    %v836 = vpop.xlane.xlu0 %835
    %837 = vadd.xlane.f32.xlu0 %v788
    %v838 = vpop.xlane.xlu0 %837
    %839 = vadd.xlane.f32.xlu0 %v789
    %v840 = vpop.xlane.xlu0 %839
    %841 = vadd.xlane.f32.xlu0 %v790
    %v842 = vpop.xlane.xlu0 %841
    %843 = vadd.xlane.f32.xlu0 %v791
    %v844 = vpop.xlane.xlu0 %843
    %845 = vadd.xlane.f32.xlu0 %v792
    %v846 = vpop.xlane.xlu0 %845
    %847 = vadd.xlane.f32.xlu0 %v793
    %v848 = vpop.xlane.xlu0 %847
    %849 = vadd.xlane.f32.xlu0 %v794
    %v850 = vpop.xlane.xlu0 %849
    %851 = vadd.xlane.f32.xlu0 %v795
    %v852 = vpop.xlane.xlu0 %851
    %853 = vadd.xlane.f32.xlu0 %v796
    %v854 = vpop.xlane.xlu0 %853
    %855 = vadd.xlane.f32.xlu0 %v797
    %v856 = vpop.xlane.xlu0 %855
    %857 = vadd.xlane.f32.xlu0 %v798
    %v858 = vpop.xlane.xlu0 %857
    %859 = vadd.xlane.f32.xlu0 %v799
    %v860 = vpop.xlane.xlu0 %859
    %861 = vadd.xlane.f32.xlu0 %v800
    %v862 = vpop.xlane.xlu0 %861
    %863 = vadd.xlane.f32.xlu0 %v801
    %v864 = vpop.xlane.xlu0 %863
    %865 = vadd.xlane.f32.xlu0 %v802
    %v866 = vpop.xlane.xlu0 %865
    %v867 = vadd.f32 %v819, %v836
    %v868 = vadd.f32 %v820, %v838
    %v869 = vadd.f32 %v821, %v840
    %v870 = vadd.f32 %v822, %v842
    %v871 = vadd.f32 %v823, %v844
    %v872 = vadd.f32 %v824, %v846
    %v873 = vadd.f32 %v825, %v848
    %v874 = vadd.f32 %v826, %v850
    %v875 = vadd.f32 %v827, %v852
    %v876 = vadd.f32 %v828, %v854
    %v877 = vadd.f32 %v829, %v856
    %v878 = vadd.f32 %v830, %v858
    %v879 = vadd.f32 %v831, %v860
    %v880 = vadd.f32 %v832, %v862
    %v881 = vadd.f32 %v833, %v864
    %v882 = vadd.f32 %v834, %v866
    %vm883 = vcmask 7168
    %884 = vst.msk [vmem:[#allocation3] sm:$0xff] %vm883, %v867
    %885 = vst.msk [vmem:[#allocation3 + $0x8] sm:$0xff] %vm883, %v868
    %886 = vst.msk [vmem:[#allocation3 + $0x10] sm:$0xff] %vm883, %v869
    %887 = vst.msk [vmem:[#allocation3 + $0x18] sm:$0xff] %vm883, %v870
    %888 = vst.msk [vmem:[#allocation3 + $0x20] sm:$0xff] %vm883, %v871
    %889 = vst.msk [vmem:[#allocation3 + $0x28] sm:$0xff] %vm883, %v872
    %890 = vst.msk [vmem:[#allocation3 + $0x30] sm:$0xff] %vm883, %v873
    %891 = vst.msk [vmem:[#allocation3 + $0x38] sm:$0xff] %vm883, %v874
    %892 = vst.msk [vmem:[#allocation3 + $0x40] sm:$0xff] %vm883, %v875
    %893 = vst.msk [vmem:[#allocation3 + $0x48] sm:$0xff] %vm883, %v876
    %894 = vst.msk [vmem:[#allocation3 + $0x50] sm:$0xff] %vm883, %v877
    %895 = vst.msk [vmem:[#allocation3 + $0x58] sm:$0xff] %vm883, %v878
    %896 = vst.msk [vmem:[#allocation3 + $0x60] sm:$0xff] %vm883, %v879
    %897 = vst.msk [vmem:[#allocation3 + $0x68] sm:$0xff] %vm883, %v880
    %898 = vst.msk [vmem:[#allocation3 + $0x70] sm:$0xff] %vm883, %v881
    %899 = vst.msk [vmem:[#allocation3 + $0x78] sm:$0xff] %vm883, %v882
    %900 = vst.msk [vmem:[#allocation2] sm:$0xff] %vm883, %v595
    %901 = vst.msk [vmem:[#allocation2 + $0x8] sm:$0xff] %vm883, %v596
    %902 = vst.msk [vmem:[#allocation2 + $0x10] sm:$0xff] %vm883, %v597
    %903 = vst.msk [vmem:[#allocation2 + $0x18] sm:$0xff] %vm883, %v598
    %904 = vst.msk [vmem:[#allocation2 + $0x20] sm:$0xff] %vm883, %v599
    %905 = vst.msk [vmem:[#allocation2 + $0x28] sm:$0xff] %vm883, %v600
    %906 = vst.msk [vmem:[#allocation2 + $0x30] sm:$0xff] %vm883, %v601
    %907 = vst.msk [vmem:[#allocation2 + $0x38] sm:$0xff] %vm883, %v602
    %908 = vst.msk [vmem:[#allocation2 + $0x40] sm:$0xff] %vm883, %v603
    %909 = vst.msk [vmem:[#allocation2 + $0x48] sm:$0xff] %vm883, %v604
    %910 = vst.msk [vmem:[#allocation2 + $0x50] sm:$0xff] %vm883, %v605
    %911 = vst.msk [vmem:[#allocation2 + $0x58] sm:$0xff] %vm883, %v606
    %912 = vst.msk [vmem:[#allocation2 + $0x60] sm:$0xff] %vm883, %v607
    %913 = vst.msk [vmem:[#allocation2 + $0x68] sm:$0xff] %vm883, %v608
    %914 = vst.msk [vmem:[#allocation2 + $0x70] sm:$0xff] %vm883, %v609
    %915 = vst.msk [vmem:[#allocation2 + $0x78] sm:$0xff] %vm883, %v610
    %v916 = vld [vmem:[#allocation4] sm:$0xff]
    %v917 = vld [vmem:[#allocation4 + $0x8] sm:$0xff]
    %v918 = vld [vmem:[#allocation4 + $0x10] sm:$0xff]
    %v919 = vld [vmem:[#allocation4 + $0x18] sm:$0xff]
    %v920 = vld [vmem:[#allocation4 + $0x20] sm:$0xff]
    %v921 = vld [vmem:[#allocation4 + $0x28] sm:$0xff]
    %v922 = vld [vmem:[#allocation4 + $0x30] sm:$0xff]
    %v923 = vld [vmem:[#allocation4 + $0x38] sm:$0xff]
    %v924 = vld [vmem:[#allocation4 + $0x40] sm:$0xff]
    %v925 = vld [vmem:[#allocation4 + $0x48] sm:$0xff]
    %v926 = vld [vmem:[#allocation4 + $0x50] sm:$0xff]
    %v927 = vld [vmem:[#allocation4 + $0x58] sm:$0xff]
    %v928 = vld [vmem:[#allocation4 + $0x60] sm:$0xff]
    %v929 = vld [vmem:[#allocation4 + $0x68] sm:$0xff]
    %v930 = vld [vmem:[#allocation4 + $0x70] sm:$0xff]
    %v931 = vld [vmem:[#allocation4 + $0x78] sm:$0xff]
    %v932 = vmul.f32 %v515, %v277
    %v933 = vmul.f32 %v516, %v278
    %v934 = vmul.f32 %v517, %v279
    %v935 = vmul.f32 %v518, %v280
    %v936 = vmul.f32 %v519, %v281
    %v937 = vmul.f32 %v520, %v282
    %v938 = vmul.f32 %v521, %v283
    %v939 = vmul.f32 %v522, %v284
    %v940 = vmul.f32 %v523, %v285
    %v941 = vmul.f32 %v524, %v286
    %v942 = vmul.f32 %v525, %v287
    %v943 = vmul.f32 %v526, %v288
    %v944 = vmul.f32 %v527, %v289
    %v945 = vmul.f32 %v528, %v290
    %v946 = vmul.f32 %v529, %v291
    %v947 = vmul.f32 %v530, %v292
    %948 = vadd.xlane.f32.xlu0 %v932
    %v949 = vpop.xlane.xlu0 %948
    %950 = vadd.xlane.f32.xlu0 %v933
    %v951 = vpop.xlane.xlu0 %950
    %952 = vadd.xlane.f32.xlu0 %v934
    %v953 = vpop.xlane.xlu0 %952
    %954 = vadd.xlane.f32.xlu0 %v935
    %v955 = vpop.xlane.xlu0 %954
    %956 = vadd.xlane.f32.xlu0 %v936
    %v957 = vpop.xlane.xlu0 %956
    %958 = vadd.xlane.f32.xlu0 %v937
    %v959 = vpop.xlane.xlu0 %958
    %960 = vadd.xlane.f32.xlu0 %v938
    %v961 = vpop.xlane.xlu0 %960
    %962 = vadd.xlane.f32.xlu0 %v939
    %v963 = vpop.xlane.xlu0 %962
    %964 = vadd.xlane.f32.xlu0 %v940
    %v965 = vpop.xlane.xlu0 %964
    %966 = vadd.xlane.f32.xlu0 %v941
    %v967 = vpop.xlane.xlu0 %966
    %968 = vadd.xlane.f32.xlu0 %v942
    %v969 = vpop.xlane.xlu0 %968
    %970 = vadd.xlane.f32.xlu0 %v943
    %v971 = vpop.xlane.xlu0 %970
    %972 = vadd.xlane.f32.xlu0 %v944
    %v973 = vpop.xlane.xlu0 %972
    %974 = vadd.xlane.f32.xlu0 %v945
    %v975 = vpop.xlane.xlu0 %974
    %976 = vadd.xlane.f32.xlu0 %v946
    %v977 = vpop.xlane.xlu0 %976
    %978 = vadd.xlane.f32.xlu0 %v947
    %v979 = vpop.xlane.xlu0 %978
    %v980 = vadd.f32 %v916, %v949
    %v981 = vadd.f32 %v917, %v951
    %v982 = vadd.f32 %v918, %v953
    %v983 = vadd.f32 %v919, %v955
    %v984 = vadd.f32 %v920, %v957
    %v985 = vadd.f32 %v921, %v959
    %v986 = vadd.f32 %v922, %v961
    %v987 = vadd.f32 %v923, %v963
    %v988 = vadd.f32 %v924, %v965
    %v989 = vadd.f32 %v925, %v967
    %v990 = vadd.f32 %v926, %v969
    %v991 = vadd.f32 %v927, %v971
    %v992 = vadd.f32 %v928, %v973
    %v993 = vadd.f32 %v929, %v975
    %v994 = vadd.f32 %v930, %v977
    %v995 = vadd.f32 %v931, %v979
    %996 = vst.msk [vmem:[#allocation4] sm:$0xff] %vm883, %v980
    %997 = vst.msk [vmem:[#allocation4 + $0x8] sm:$0xff] %vm883, %v981
    %998 = vst.msk [vmem:[#allocation4 + $0x10] sm:$0xff] %vm883, %v982
    %999 = vst.msk [vmem:[#allocation4 + $0x18] sm:$0xff] %vm883, %v983
    %1000 = vst.msk [vmem:[#allocation4 + $0x20] sm:$0xff] %vm883, %v984
    %1001 = vst.msk [vmem:[#allocation4 + $0x28] sm:$0xff] %vm883, %v985
    %1002 = vst.msk [vmem:[#allocation4 + $0x30] sm:$0xff] %vm883, %v986
    %1003 = vst.msk [vmem:[#allocation4 + $0x38] sm:$0xff] %vm883, %v987
    %1004 = vst.msk [vmem:[#allocation4 + $0x40] sm:$0xff] %vm883, %v988
    %1005 = vst.msk [vmem:[#allocation4 + $0x48] sm:$0xff] %vm883, %v989
    %1006 = vst.msk [vmem:[#allocation4 + $0x50] sm:$0xff] %vm883, %v990
    %1007 = vst.msk [vmem:[#allocation4 + $0x58] sm:$0xff] %vm883, %v991
    %1008 = vst.msk [vmem:[#allocation4 + $0x60] sm:$0xff] %vm883, %v992
    %1009 = vst.msk [vmem:[#allocation4 + $0x68] sm:$0xff] %vm883, %v993
    %1010 = vst.msk [vmem:[#allocation4 + $0x70] sm:$0xff] %vm883, %v994
    %1011 = vst.msk [vmem:[#allocation4 + $0x78] sm:$0xff] %vm883, %v995
    %v1012 = vld [vmem:[#allocation5] sm:$0xff]
    %v1013 = vld [vmem:[#allocation5 + $0x8] sm:$0xff]
    %v1014 = vld [vmem:[#allocation5 + $0x10] sm:$0xff]
    %v1015 = vld [vmem:[#allocation5 + $0x18] sm:$0xff]
    %v1016 = vld [vmem:[#allocation5 + $0x20] sm:$0xff]
    %v1017 = vld [vmem:[#allocation5 + $0x28] sm:$0xff]
    %v1018 = vld [vmem:[#allocation5 + $0x30] sm:$0xff]
    %v1019 = vld [vmem:[#allocation5 + $0x38] sm:$0xff]
    %v1020 = vld [vmem:[#allocation5 + $0x40] sm:$0xff]
    %v1021 = vld [vmem:[#allocation5 + $0x48] sm:$0xff]
    %v1022 = vld [vmem:[#allocation5 + $0x50] sm:$0xff]
    %v1023 = vld [vmem:[#allocation5 + $0x58] sm:$0xff]
    %v1024 = vld [vmem:[#allocation5 + $0x60] sm:$0xff]
    %v1025 = vld [vmem:[#allocation5 + $0x68] sm:$0xff]
    %v1026 = vld [vmem:[#allocation5 + $0x70] sm:$0xff]
    %v1027 = vld [vmem:[#allocation5 + $0x78] sm:$0xff]
    %1028 = vadd.xlane.f32.xlu0 %v515
    %v1029 = vpop.xlane.xlu0 %1028
    %1030 = vadd.xlane.f32.xlu0 %v516
    %v1031 = vpop.xlane.xlu0 %1030
    %1032 = vadd.xlane.f32.xlu0 %v517
    %v1033 = vpop.xlane.xlu0 %1032
    %1034 = vadd.xlane.f32.xlu0 %v518
    %v1035 = vpop.xlane.xlu0 %1034
    %1036 = vadd.xlane.f32.xlu0 %v519
    %v1037 = vpop.xlane.xlu0 %1036
    %1038 = vadd.xlane.f32.xlu0 %v520
    %v1039 = vpop.xlane.xlu0 %1038
    %1040 = vadd.xlane.f32.xlu0 %v521
    %v1041 = vpop.xlane.xlu0 %1040
    %1042 = vadd.xlane.f32.xlu0 %v522
    %v1043 = vpop.xlane.xlu0 %1042
    %1044 = vadd.xlane.f32.xlu0 %v523
    %v1045 = vpop.xlane.xlu0 %1044
    %1046 = vadd.xlane.f32.xlu0 %v524
    %v1047 = vpop.xlane.xlu0 %1046
    %1048 = vadd.xlane.f32.xlu0 %v525
    %v1049 = vpop.xlane.xlu0 %1048
    %1050 = vadd.xlane.f32.xlu0 %v526
    %v1051 = vpop.xlane.xlu0 %1050
    %1052 = vadd.xlane.f32.xlu0 %v527
    %v1053 = vpop.xlane.xlu0 %1052
    %1054 = vadd.xlane.f32.xlu0 %v528
    %v1055 = vpop.xlane.xlu0 %1054
    %1056 = vadd.xlane.f32.xlu0 %v529
    %v1057 = vpop.xlane.xlu0 %1056
    %1058 = vadd.xlane.f32.xlu0 %v530
    %v1059 = vpop.xlane.xlu0 %1058
    %v1060 = vadd.f32 %v1012, %v1029
    %v1061 = vadd.f32 %v1013, %v1031
    %v1062 = vadd.f32 %v1014, %v1033
    %v1063 = vadd.f32 %v1015, %v1035
    %v1064 = vadd.f32 %v1016, %v1037
    %v1065 = vadd.f32 %v1017, %v1039
    %v1066 = vadd.f32 %v1018, %v1041
    %v1067 = vadd.f32 %v1019, %v1043
    %v1068 = vadd.f32 %v1020, %v1045
    %v1069 = vadd.f32 %v1021, %v1047
    %v1070 = vadd.f32 %v1022, %v1049
    %v1071 = vadd.f32 %v1023, %v1051
    %v1072 = vadd.f32 %v1024, %v1053
    %v1073 = vadd.f32 %v1025, %v1055
    %v1074 = vadd.f32 %v1026, %v1057
    %v1075 = vadd.f32 %v1027, %v1059
    %1076 = vst.msk [vmem:[#allocation5] sm:$0xff] %vm883, %v1060
    %1077 = vst.msk [vmem:[#allocation5 + $0x8] sm:$0xff] %vm883, %v1061
    %1078 = vst.msk [vmem:[#allocation5 + $0x10] sm:$0xff] %vm883, %v1062
    %1079 = vst.msk [vmem:[#allocation5 + $0x18] sm:$0xff] %vm883, %v1063
    %1080 = vst.msk [vmem:[#allocation5 + $0x20] sm:$0xff] %vm883, %v1064
    %1081 = vst.msk [vmem:[#allocation5 + $0x28] sm:$0xff] %vm883, %v1065
    %1082 = vst.msk [vmem:[#allocation5 + $0x30] sm:$0xff] %vm883, %v1066
    %1083 = vst.msk [vmem:[#allocation5 + $0x38] sm:$0xff] %vm883, %v1067
    %1084 = vst.msk [vmem:[#allocation5 + $0x40] sm:$0xff] %vm883, %v1068
    %1085 = vst.msk [vmem:[#allocation5 + $0x48] sm:$0xff] %vm883, %v1069
    %1086 = vst.msk [vmem:[#allocation5 + $0x50] sm:$0xff] %vm883, %v1070
    %1087 = vst.msk [vmem:[#allocation5 + $0x58] sm:$0xff] %vm883, %v1071
    %1088 = vst.msk [vmem:[#allocation5 + $0x60] sm:$0xff] %vm883, %v1072
    %1089 = vst.msk [vmem:[#allocation5 + $0x68] sm:$0xff] %vm883, %v1073
    %1090 = vst.msk [vmem:[#allocation5 + $0x70] sm:$0xff] %vm883, %v1074
    %1091 = vst.msk [vmem:[#allocation5 + $0x78] sm:$0xff] %vm883, %v1075
    // Predicated region
    $region26: #{tpu_custom_call.1} parent=1 // pred_check
      %p1092 = pneg %p31
    $region27: #{tpu_custom_call.1} parent=1 // pred_check_branch
      %1094 = sbr.rel (%p1092) target = $region29
    $region28: #{tpu_custom_call.1} parent=1 // pred_region
      %v1095 = vld [vmem:[#allocation2] sm:$0xff]
      %v1096 = vld [vmem:[#allocation2 + $0x8] sm:$0xff]
      %v1097 = vld [vmem:[#allocation2 + $0x10] sm:$0xff]
      %v1098 = vld [vmem:[#allocation2 + $0x18] sm:$0xff]
      %v1099 = vld [vmem:[#allocation2 + $0x20] sm:$0xff]
      %v1100 = vld [vmem:[#allocation2 + $0x28] sm:$0xff]
      %v1101 = vld [vmem:[#allocation2 + $0x30] sm:$0xff]
      %v1102 = vld [vmem:[#allocation2 + $0x38] sm:$0xff]
      %v1103 = vld [vmem:[#allocation2 + $0x40] sm:$0xff]
      %v1104 = vld [vmem:[#allocation2 + $0x48] sm:$0xff]
      %v1105 = vld [vmem:[#allocation2 + $0x50] sm:$0xff]
      %v1106 = vld [vmem:[#allocation2 + $0x58] sm:$0xff]
      %v1107 = vld [vmem:[#allocation2 + $0x60] sm:$0xff]
      %v1108 = vld [vmem:[#allocation2 + $0x68] sm:$0xff]
      %v1109 = vld [vmem:[#allocation2 + $0x70] sm:$0xff]
      %v1110 = vld [vmem:[#allocation2 + $0x78] sm:$0xff]
      %v1111 = vld [vmem:[#allocation3] sm:$0xff]
      %v1112 = vld [vmem:[#allocation3 + $0x8] sm:$0xff]
      %v1113 = vld [vmem:[#allocation3 + $0x10] sm:$0xff]
      %v1114 = vld [vmem:[#allocation3 + $0x18] sm:$0xff]
      %v1115 = vld [vmem:[#allocation3 + $0x20] sm:$0xff]
      %v1116 = vld [vmem:[#allocation3 + $0x28] sm:$0xff]
      %v1117 = vld [vmem:[#allocation3 + $0x30] sm:$0xff]
      %v1118 = vld [vmem:[#allocation3 + $0x38] sm:$0xff]
      %v1119 = vld [vmem:[#allocation3 + $0x40] sm:$0xff]
      %v1120 = vld [vmem:[#allocation3 + $0x48] sm:$0xff]
      %v1121 = vld [vmem:[#allocation3 + $0x50] sm:$0xff]
      %v1122 = vld [vmem:[#allocation3 + $0x58] sm:$0xff]
      %v1123 = vld [vmem:[#allocation3 + $0x60] sm:$0xff]
      %v1124 = vld [vmem:[#allocation3 + $0x68] sm:$0xff]
      %v1125 = vld [vmem:[#allocation3 + $0x70] sm:$0xff]
      %v1126 = vld [vmem:[#allocation3 + $0x78] sm:$0xff]
      %v1127 = vlog2.pop %v1111
      %v1128 = vmul.f32 %v1127, 0.6931472
      %v1129 = vlog2.pop %v1112
      %v1130 = vmul.f32 %v1129, 0.6931472
      %v1131 = vlog2.pop %v1113
      %v1132 = vmul.f32 %v1131, 0.6931472
      %v1133 = vlog2.pop %v1114
      %v1134 = vmul.f32 %v1133, 0.6931472
      %v1135 = vlog2.pop %v1115
      %v1136 = vmul.f32 %v1135, 0.6931472
      %v1137 = vlog2.pop %v1116
      %v1138 = vmul.f32 %v1137, 0.6931472
      %v1139 = vlog2.pop %v1117
      %v1140 = vmul.f32 %v1139, 0.6931472
      %v1141 = vlog2.pop %v1118
      %v1142 = vmul.f32 %v1141, 0.6931472
      %v1143 = vlog2.pop %v1119
      %v1144 = vmul.f32 %v1143, 0.6931472
      %v1145 = vlog2.pop %v1120
      %v1146 = vmul.f32 %v1145, 0.6931472
      %v1147 = vlog2.pop %v1121
      %v1148 = vmul.f32 %v1147, 0.6931472
      %v1149 = vlog2.pop %v1122
      %v1150 = vmul.f32 %v1149, 0.6931472
      %v1151 = vlog2.pop %v1123
      %v1152 = vmul.f32 %v1151, 0.6931472
      %v1153 = vlog2.pop %v1124
      %v1154 = vmul.f32 %v1153, 0.6931472
      %v1155 = vlog2.pop %v1125
      %v1156 = vmul.f32 %v1155, 0.6931472
      %v1157 = vlog2.pop %v1126
      %v1158 = vmul.f32 %v1157, 0.6931472
      %v1159 = vadd.f32 %v1095, %v1128
      %v1160 = vadd.f32 %v1096, %v1130
      %v1161 = vadd.f32 %v1097, %v1132
      %v1162 = vadd.f32 %v1098, %v1134
      %v1163 = vadd.f32 %v1099, %v1136
      %v1164 = vadd.f32 %v1100, %v1138
      %v1165 = vadd.f32 %v1101, %v1140
      %v1166 = vadd.f32 %v1102, %v1142
      %v1167 = vadd.f32 %v1103, %v1144
      %v1168 = vadd.f32 %v1104, %v1146
      %v1169 = vadd.f32 %v1105, %v1148
      %v1170 = vadd.f32 %v1106, %v1150
      %v1171 = vadd.f32 %v1107, %v1152
      %v1172 = vadd.f32 %v1108, %v1154
      %v1173 = vadd.f32 %v1109, %v1156
      %v1174 = vadd.f32 %v1110, %v1158
      %v1175 = vld [vmem:[#allocation5] sm:$0xff]
      %v1176 = vld [vmem:[#allocation5 + $0x8] sm:$0xff]
      %v1177 = vld [vmem:[#allocation5 + $0x10] sm:$0xff]
      %v1178 = vld [vmem:[#allocation5 + $0x18] sm:$0xff]
      %v1179 = vld [vmem:[#allocation5 + $0x20] sm:$0xff]
      %v1180 = vld [vmem:[#allocation5 + $0x28] sm:$0xff]
      %v1181 = vld [vmem:[#allocation5 + $0x30] sm:$0xff]
      %v1182 = vld [vmem:[#allocation5 + $0x38] sm:$0xff]
      %v1183 = vld [vmem:[#allocation5 + $0x40] sm:$0xff]
      %v1184 = vld [vmem:[#allocation5 + $0x48] sm:$0xff]
      %v1185 = vld [vmem:[#allocation5 + $0x50] sm:$0xff]
      %v1186 = vld [vmem:[#allocation5 + $0x58] sm:$0xff]
      %v1187 = vld [vmem:[#allocation5 + $0x60] sm:$0xff]
      %v1188 = vld [vmem:[#allocation5 + $0x68] sm:$0xff]
      %v1189 = vld [vmem:[#allocation5 + $0x70] sm:$0xff]
      %v1190 = vld [vmem:[#allocation5 + $0x78] sm:$0xff]
      %vm1191 = vcmp.gt.f32.partialorder %v1175, 0.0
      %vm1192 = vcmp.gt.f32.partialorder %v1176, 0.0
      %vm1193 = vcmp.gt.f32.partialorder %v1177, 0.0
      %vm1194 = vcmp.gt.f32.partialorder %v1178, 0.0
      %vm1195 = vcmp.gt.f32.partialorder %v1179, 0.0
      %vm1196 = vcmp.gt.f32.partialorder %v1180, 0.0
      %vm1197 = vcmp.gt.f32.partialorder %v1181, 0.0
      %vm1198 = vcmp.gt.f32.partialorder %v1182, 0.0
      %vm1199 = vcmp.gt.f32.partialorder %v1183, 0.0
      %vm1200 = vcmp.gt.f32.partialorder %v1184, 0.0
      %vm1201 = vcmp.gt.f32.partialorder %v1185, 0.0
      %vm1202 = vcmp.gt.f32.partialorder %v1186, 0.0
      %vm1203 = vcmp.gt.f32.partialorder %v1187, 0.0
      %vm1204 = vcmp.gt.f32.partialorder %v1188, 0.0
      %vm1205 = vcmp.gt.f32.partialorder %v1189, 0.0
      %vm1206 = vcmp.gt.f32.partialorder %v1190, 0.0
      %v1207 = vsel %vm1191, %v1175, 1.0
      %v1208 = vsel %vm1192, %v1176, 1.0
      %v1209 = vsel %vm1193, %v1177, 1.0
      %v1210 = vsel %vm1194, %v1178, 1.0
      %v1211 = vsel %vm1195, %v1179, 1.0
      %v1212 = vsel %vm1196, %v1180, 1.0
      %v1213 = vsel %vm1197, %v1181, 1.0
      %v1214 = vsel %vm1198, %v1182, 1.0
      %v1215 = vsel %vm1199, %v1183, 1.0
      %v1216 = vsel %vm1200, %v1184, 1.0
      %v1217 = vsel %vm1201, %v1185, 1.0
      %v1218 = vsel %vm1202, %v1186, 1.0
      %v1219 = vsel %vm1203, %v1187, 1.0
      %v1220 = vsel %vm1204, %v1188, 1.0
      %v1221 = vsel %vm1205, %v1189, 1.0
      %v1222 = vsel %vm1206, %v1190, 1.0
      %v1223 = vld [vmem:[#allocation4] sm:$0xff]
      %v1224 = vld [vmem:[#allocation4 + $0x8] sm:$0xff]
      %v1225 = vld [vmem:[#allocation4 + $0x10] sm:$0xff]
      %v1226 = vld [vmem:[#allocation4 + $0x18] sm:$0xff]
      %v1227 = vld [vmem:[#allocation4 + $0x20] sm:$0xff]
      %v1228 = vld [vmem:[#allocation4 + $0x28] sm:$0xff]
      %v1229 = vld [vmem:[#allocation4 + $0x30] sm:$0xff]
      %v1230 = vld [vmem:[#allocation4 + $0x38] sm:$0xff]
      %v1231 = vld [vmem:[#allocation4 + $0x40] sm:$0xff]
      %v1232 = vld [vmem:[#allocation4 + $0x48] sm:$0xff]
      %v1233 = vld [vmem:[#allocation4 + $0x50] sm:$0xff]
      %v1234 = vld [vmem:[#allocation4 + $0x58] sm:$0xff]
      %v1235 = vld [vmem:[#allocation4 + $0x60] sm:$0xff]
      %v1236 = vld [vmem:[#allocation4 + $0x68] sm:$0xff]
      %v1237 = vld [vmem:[#allocation4 + $0x70] sm:$0xff]
      %v1238 = vld [vmem:[#allocation4 + $0x78] sm:$0xff]
      %v1239 = vmul.f32 %v1175, %v1159
      %v1240 = vmul.f32 %v1176, %v1160
      %v1241 = vmul.f32 %v1177, %v1161
      %v1242 = vmul.f32 %v1178, %v1162
      %v1243 = vmul.f32 %v1179, %v1163
      %v1244 = vmul.f32 %v1180, %v1164
      %v1245 = vmul.f32 %v1181, %v1165
      %v1246 = vmul.f32 %v1182, %v1166
      %v1247 = vmul.f32 %v1183, %v1167
      %v1248 = vmul.f32 %v1184, %v1168
      %v1249 = vmul.f32 %v1185, %v1169
      %v1250 = vmul.f32 %v1186, %v1170
      %v1251 = vmul.f32 %v1187, %v1171
      %v1252 = vmul.f32 %v1188, %v1172
      %v1253 = vmul.f32 %v1189, %v1173
      %v1254 = vmul.f32 %v1190, %v1174
      %v1255 = vsub.f32 %v1223, %v1239
      %v1256 = vsub.f32 %v1224, %v1240
      %v1257 = vsub.f32 %v1225, %v1241
      %v1258 = vsub.f32 %v1226, %v1242
      %v1259 = vsub.f32 %v1227, %v1243
      %v1260 = vsub.f32 %v1228, %v1244
      %v1261 = vsub.f32 %v1229, %v1245
      %v1262 = vsub.f32 %v1230, %v1246
      %v1263 = vsub.f32 %v1231, %v1247
      %v1264 = vsub.f32 %v1232, %v1248
      %v1265 = vsub.f32 %v1233, %v1249
      %v1266 = vsub.f32 %v1234, %v1250
      %v1267 = vsub.f32 %v1235, %v1251
      %v1268 = vsub.f32 %v1236, %v1252
      %v1269 = vsub.f32 %v1237, %v1253
      %v1270 = vsub.f32 %v1238, %v1254
      %v1271 = vrcp.pop %v1207
      %v1272 = vmul.f32 %v1255, %v1271
      %v1273 = vrcp.pop %v1208
      %v1274 = vmul.f32 %v1256, %v1273
      %v1275 = vrcp.pop %v1209
      %v1276 = vmul.f32 %v1257, %v1275
      %v1277 = vrcp.pop %v1210
      %v1278 = vmul.f32 %v1258, %v1277
      %v1279 = vrcp.pop %v1211
      %v1280 = vmul.f32 %v1259, %v1279
      %v1281 = vrcp.pop %v1212
      %v1282 = vmul.f32 %v1260, %v1281
      %v1283 = vrcp.pop %v1213
      %v1284 = vmul.f32 %v1261, %v1283
      %v1285 = vrcp.pop %v1214
      %v1286 = vmul.f32 %v1262, %v1285
      %v1287 = vrcp.pop %v1215
      %v1288 = vmul.f32 %v1263, %v1287
      %v1289 = vrcp.pop %v1216
      %v1290 = vmul.f32 %v1264, %v1289
      %v1291 = vrcp.pop %v1217
      %v1292 = vmul.f32 %v1265, %v1291
      %v1293 = vrcp.pop %v1218
      %v1294 = vmul.f32 %v1266, %v1293
      %v1295 = vrcp.pop %v1219
      %v1296 = vmul.f32 %v1267, %v1295
      %v1297 = vrcp.pop %v1220
      %v1298 = vmul.f32 %v1268, %v1297
      %v1299 = vrcp.pop %v1221
      %v1300 = vmul.f32 %v1269, %v1299
      %v1301 = vrcp.pop %v1222
      %v1302 = vmul.f32 %v1270, %v1301
      %v1303 = vsel %vm1191, %v1272, 0.0
      %v1304 = vsel %vm1192, %v1274, 0.0
      %v1305 = vsel %vm1193, %v1276, 0.0
      %v1306 = vsel %vm1194, %v1278, 0.0
      %v1307 = vsel %vm1195, %v1280, 0.0
      %v1308 = vsel %vm1196, %v1282, 0.0
      %v1309 = vsel %vm1197, %v1284, 0.0
      %v1310 = vsel %vm1198, %v1286, 0.0
      %v1311 = vsel %vm1199, %v1288, 0.0
      %v1312 = vsel %vm1200, %v1290, 0.0
      %v1313 = vsel %vm1201, %v1292, 0.0
      %v1314 = vsel %vm1202, %v1294, 0.0
      %v1315 = vsel %vm1203, %v1296, 0.0
      %v1316 = vsel %vm1204, %v1298, 0.0
      %v1317 = vsel %vm1205, %v1300, 0.0
      %v1318 = vsel %vm1206, %v1302, 0.0
      %v1319 = vmul.f32 %v1303, -1.0
      %v1320 = vmul.f32 %v1304, -1.0
      %v1321 = vmul.f32 %v1305, -1.0
      %v1322 = vmul.f32 %v1306, -1.0
      %v1323 = vmul.f32 %v1307, -1.0
      %v1324 = vmul.f32 %v1308, -1.0
      %v1325 = vmul.f32 %v1309, -1.0
      %v1326 = vmul.f32 %v1310, -1.0
      %v1327 = vmul.f32 %v1311, -1.0
      %v1328 = vmul.f32 %v1312, -1.0
      %v1329 = vmul.f32 %v1313, -1.0
      %v1330 = vmul.f32 %v1314, -1.0
      %v1331 = vmul.f32 %v1315, -1.0
      %v1332 = vmul.f32 %v1316, -1.0
      %v1333 = vmul.f32 %v1317, -1.0
      %v1334 = vmul.f32 %v1318, -1.0
      %1335 = vst.msk [vmem:[%s4] sm:$0xff] %vm883, %v1319
      %1336 = vst.msk [vmem:[%s4 + $0x8] sm:$0xff] %vm883, %v1320
      %1337 = vst.msk [vmem:[%s4 + $0x10] sm:$0xff] %vm883, %v1321
      %1338 = vst.msk [vmem:[%s4 + $0x18] sm:$0xff] %vm883, %v1322
      %1339 = vst.msk [vmem:[%s4 + $0x20] sm:$0xff] %vm883, %v1323
      %1340 = vst.msk [vmem:[%s4 + $0x28] sm:$0xff] %vm883, %v1324
      %1341 = vst.msk [vmem:[%s4 + $0x30] sm:$0xff] %vm883, %v1325
      %1342 = vst.msk [vmem:[%s4 + $0x38] sm:$0xff] %vm883, %v1326
      %1343 = vst.msk [vmem:[%s4 + $0x40] sm:$0xff] %vm883, %v1327
      %1344 = vst.msk [vmem:[%s4 + $0x48] sm:$0xff] %vm883, %v1328
      %1345 = vst.msk [vmem:[%s4 + $0x50] sm:$0xff] %vm883, %v1329
      %1346 = vst.msk [vmem:[%s4 + $0x58] sm:$0xff] %vm883, %v1330
      %1347 = vst.msk [vmem:[%s4 + $0x60] sm:$0xff] %vm883, %v1331
      %1348 = vst.msk [vmem:[%s4 + $0x68] sm:$0xff] %vm883, %v1332
      %1349 = vst.msk [vmem:[%s4 + $0x70] sm:$0xff] %vm883, %v1333
      %1350 = vst.msk [vmem:[%s4 + $0x78] sm:$0xff] %vm883, %v1334
    $region29: #{tpu_custom_call.1} parent=1 // pred_fallthru
      _
    // Predicated region
    $region30: #{tpu_custom_call.1} parent=1 // pred_check
      _
    $region31: #{tpu_custom_call.1} parent=1 // pred_check_branch
      %1352 = sbr.rel (0) target = $region33
    $region32: #{tpu_custom_call.1} parent=1 // pred_region
      _
    $region33: #{tpu_custom_call.1} parent=1 // pred_fallthru
      _
    // Predicated region
    $region34: #{tpu_custom_call.1} parent=1 // pred_check
      _
    $region35: #{tpu_custom_call.1} parent=1 // pred_check_branch
      %1354 = sbr.rel (0) target = $region37
    $region36: #{tpu_custom_call.1} parent=1 // pred_region
      _
    $region37: #{tpu_custom_call.1} parent=1 // pred_fallthru
      _
    %1355 = vsyncpa [#allocation7], 1

</llo_original>
